<compile_context>
chip_gen: v7x
topology: tpu7x:2x2x1
jax: 0.10.0
libtpu: 0.0.40
codegen_flags: <defaults>
</compile_context>

<pallas_src>
import numpy as np
import jax
import jax.numpy as jnp
from jax import lax
from jax.experimental import pallas as pl
from jax.experimental.pallas import tpu as pltpu


def _round_up(n, m):
    return ((n + m - 1) // m) * m


def _device_kind():
    try:
        return jax.devices()[0].device_kind.lower()
    except Exception:
        return ""


def _vmem_capacity_bytes():
    try:
        info = pltpu.get_tpu_info()
        cap = getattr(info, "vmem_capacity_bytes", None)
        if cap:
            return int(cap)
    except Exception:
        pass
    kind = _device_kind()
    if "v7" in kind:
        return 64 * 1024 * 1024
    return 128 * 1024 * 1024          # v5e / v6e


def _pick_tile(B, T, Dk, Dp, Rp, Lp, Sp):
    """Pick batch tile tb + padded batch Bp + vmem limit from a VMEM budget."""
    cap = _vmem_capacity_bytes()
    usable = int(cap * 0.85)          # headroom for compiler internals
    kind = _device_kind()

    weight_bytes = (4 * Dk * Rp                                   # w_ih (f32)
                    + 2 * (Rp * Rp + Lp * Rp + Rp * Lp + Lp * Dp)  # bf16 weights
                    + 4 * (3 * Rp + 2 * Lp + Dp))                  # f32 biases/states

    def need(tb):
        x_tile = T * tb * Dk * 4
        out_tile = T * tb * Dp * 4
        scratch = T * tb * Sp * 4
        return 2 * (x_tile + out_tile) + scratch + 2 * weight_bytes

    tb = min(128, _round_up(B, 8))            # fill a full MXU pass when possible
    while tb > 8 and need(tb) > usable:
        tb -= 8

    Bp = _round_up(B, tb)
    # v7x: keep >= 2 grid steps so the "parallel" batch axis can use both TCs.
    if "v7" in kind and Bp // tb < 2 and Bp >= 16:
        tb = max(8, _round_up(Bp // 2, 8))
        Bp = _round_up(B, tb)

    vmem_limit = int(min(max(int(need(tb) * 1.25), 16 * 1024 * 1024), usable))
    return tb, Bp, vmem_limit


# ----------------------------------------------------------------------------
# Pallas kernel
# ----------------------------------------------------------------------------
def _dpcca_kernel(x_ref,        # (T, tb, Dk)   f32 time-major observations
                  w_ih_ref,     # (Dk, Rp)      f32  = W_ih^T
                  w_hh_ref,     # (Rp, Rp)      bf16 = W_hh^T
                  b_ih_ref,     # (1, Rp)       f32  = b_ih + b_hh (fused)
                  h0_ref,       # (1, Rp)       f32
                  zq0_ref,      # (1, Lp)       f32
                  w_zh_ref,     # (Lp, Rp)      bf16 = W_z_to_hidden^T
                  b_zh_ref,     # (1, Rp)       f32
                  w_hl_ref,     # (Rp, Lp)      bf16 = W_hidden_to_loc^T
                  b_hl_ref,     # (1, Lp)       f32
                  w_em_ref,     # (Lp, Dp)      bf16 = (W_emission * mask)^T
                  b_em_ref,     # (1, Dp)       f32
                  xloc_ref,     # out: (T, tb, Dp) f32
                  sc_ref):      # scratch: (T, tb, Sp) f32, Sp = max(Rp, Lp)
    T, tb, Dk = x_ref.shape
    Rp = w_hh_ref.shape[0]
    Lp = w_hl_ref.shape[1]
    Dp = w_em_ref.shape[1]

    unroll = True if T <= 64 else 16

    # ---- Phase 1: hoisted RNN input projection (one big MXU matmul) --------
    x2 = x_ref[...].reshape(T * tb, Dk)
    pre = (jnp.dot(x2, w_ih_ref[...], preferred_element_type=jnp.float32)
           + b_ih_ref[...])                            # fused b_ih + b_hh
    sc_ref[:, :, :Rp] = pre.reshape(T, tb, Rp)

    # ---- Phase 2: backward relu-RNN recurrence (flip -> nn.RNN -> flip) ----
    w_hh = w_hh_ref[...]                               # hoisted loop-invariant
    h_init = jnp.broadcast_to(h0_ref[...], (tb, Rp))

    def rnn_step(s, h):
        t = T - 1 - s
        h_new = jnp.maximum(
            sc_ref[t, :, :Rp]
            + jnp.dot(h.astype(jnp.bfloat16), w_hh,
                      preferred_element_type=jnp.float32),
            0.0)
        sc_ref[t, :, :Rp] = h_new                      # pre-act -> hidden state
        return h_new

    lax.fori_loop(0, T, rnn_step, h_init, unroll=unroll)

    # ---- Phase 3: forward combiner chain ------------------------------------
    # TODO(synk): combiner's softplus `scale` head is dead code in
    # DPCCA.forward (z_all_t = z_loc only), so it is not computed here.
    w_zh = w_zh_ref[...]                               # hoisted loop-invariants
    w_hl = w_hl_ref[...]
    b_zh_b = jnp.broadcast_to(b_zh_ref[...], (tb, Rp))
    b_hl_b = jnp.broadcast_to(b_hl_ref[...], (tb, Lp))
    z_init = jnp.broadcast_to(zq0_ref[...], (tb, Lp))

    def fwd_step(t, z_prev):
        h_comb = 0.5 * (jnp.tanh(
            jnp.dot(z_prev.astype(jnp.bfloat16), w_zh,
                    preferred_element_type=jnp.float32) + b_zh_b)
            + sc_ref[t, :, :Rp])
        z_loc = (jnp.dot(h_comb.astype(jnp.bfloat16), w_hl,
                         preferred_element_type=jnp.float32) + b_hl_b)
        sc_ref[t, :, :Lp] = z_loc                      # hidden -> z_loc (reuse)
        return z_loc

    lax.fori_loop(0, T, fwd_step, z_init, unroll=unroll)

    # ---- Phase 4: hoisted masked-emission matmul (one big MXU matmul) -------
    z_all = sc_ref[:, :, :Lp].reshape(T * tb, Lp).astype(jnp.bfloat16)
    xl = (jnp.dot(z_all, w_em_ref[...], preferred_element_type=jnp.float32)
          + b_em_ref[...])
    xloc_ref[...] = xl.reshape(T, tb, Dp)


# ----------------------------------------------------------------------------
# Wrapper
# ----------------------------------------------------------------------------
def dpcca_forward(params, mini_batch_list, obs_dims, latent_dims, rnn_dim):
    x = jnp.concatenate(mini_batch_list, axis=-1).astype(jnp.float32)  # (B,T,D)
    B, T, D = x.shape
    L = sum(latent_dims)
    R = rnn_dim

    Dk = _round_up(D, 8)        # input K dim: sublane-aligned only (no 128 pad)
    Dp = _round_up(D, 128)      # output kept lane-dense (big measured lever)
    Rp = _round_up(R, 128)
    Lp = _round_up(L, 128)
    Sp = max(Rp, Lp)

    tb, Bp, vmem_limit = _pick_tile(B, T, Dk, Dp, Rp, Lp, Sp)

    def pad2(a, rows, cols):
        return jnp.pad(a, ((0, rows - a.shape[0]), (0, cols - a.shape[1])))

    # time-major observations (T, Bp, Dk) — only tiny sublane/batch padding
    x_tm = jnp.transpose(x, (1, 0, 2))
    x_tm = jnp.pad(x_tm, ((0, 0), (0, Bp - B), (0, Dk - D)))

    w_em_masked = params["w_em"] * params["emission_mask"]  # torch: weight *= mask
    bias_ihhh = params["b_ih"] + params["b_hh"]             # fused RNN biases
    bf16 = jnp.bfloat16

    ins = [
        x_tm,                                                    # f32
        pad2(params["w_ih"].T, Dk, Rp),                          # (Dk, Rp) f32
        pad2(params["w_hh"].T, Rp, Rp).astype(bf16),             # (Rp, Rp)
        pad2(bias_ihhh[None, :], 1, Rp),                         # (1, Rp)
        pad2(params["h_0"][None, :], 1, Rp),                     # (1, Rp)
        pad2(params["z_q_0"][None, :], 1, Lp),                   # (1, Lp)
        pad2(params["w_zh"].T, Lp, Rp).astype(bf16),             # (Lp, Rp)
        pad2(params["b_zh"][None, :], 1, Rp),                    # (1, Rp)
        pad2(params["w_hl"].T, Rp, Lp).astype(bf16),             # (Rp, Lp)
        pad2(params["b_hl"][None, :], 1, Lp),                    # (1, Lp)
        pad2(w_em_masked.T, Lp, Dp).astype(bf16),                # (Lp, Dp)
        pad2(params["b_em"][None, :], 1, Dp),                    # (1, Dp)
    ]

    in_specs = [
        pl.BlockSpec((T, tb, Dk), lambda b: (0, b, 0)),          # x: tiled batch
        pl.BlockSpec((Dk, Rp), lambda b: (0, 0)),
        pl.BlockSpec((Rp, Rp), lambda b: (0, 0)),
        pl.BlockSpec((1, Rp), lambda b: (0, 0)),
        pl.BlockSpec((1, Rp), lambda b: (0, 0)),
        pl.BlockSpec((1, Lp), lambda b: (0, 0)),
        pl.BlockSpec((Lp, Rp), lambda b: (0, 0)),
        pl.BlockSpec((1, Rp), lambda b: (0, 0)),
        pl.BlockSpec((Rp, Lp), lambda b: (0, 0)),
        pl.BlockSpec((1, Lp), lambda b: (0, 0)),
        pl.BlockSpec((Lp, Dp), lambda b: (0, 0)),
        pl.BlockSpec((1, Dp), lambda b: (0, 0)),
    ]

    xloc_tm = pl.pallas_call(
        _dpcca_kernel,
        out_shape=jax.ShapeDtypeStruct((T, Bp, Dp), jnp.float32),
        grid=(Bp // tb,),
        in_specs=in_specs,
        out_specs=pl.BlockSpec((T, tb, Dp), lambda b: (0, b, 0)),
        scratch_shapes=[
            pltpu.VMEM((T, tb, Sp), jnp.float32),   # pre-acts / hidden / z_loc
        ],
        compiler_params=pltpu.CompilerParams(
            dimension_semantics=("parallel",),      # shard batch over TCs (v7x)
            vmem_limit_bytes=vmem_limit),
    )(*ins)

    x_loc = jnp.transpose(xloc_tm[:, :B, :], (1, 0, 2))     # (B, T, Dp)
    x_scale = jnp.exp(0.5 * params["log_sigmas"])           # (num_obs,)

    grouped_reconstructions, grouped_scales = [], []
    ctr = 0
    for i, d in enumerate(obs_dims):
        grouped_reconstructions.append(x_loc[:, :, ctr:ctr + d])
        grouped_scales.append(jnp.broadcast_to(x_scale[i], (B, T, d)))
        ctr += d
    return grouped_reconstructions, grouped_scales


# ----------------------------------------------------------------------------
# Pure-JAX reference (same math, full f32, no Pallas) for a correctness check
# ----------------------------------------------------------------------------
def dpcca_reference(params, mini_batch_list, obs_dims, latent_dims, rnn_dim):
    x = jnp.concatenate(mini_batch_list, axis=-1).astype(jnp.float32)
    B, T, D = x.shape
    L = sum(latent_dims)

    h = jnp.broadcast_to(params["h_0"], (B, rnn_dim))
    rnn_out = [None] * T
    for s in range(T):
        t = T - 1 - s
        h = jax.nn.relu(x[:, t] @ params["w_ih"].T + params["b_ih"]
                        + h @ params["w_hh"].T + params["b_hh"])
        rnn_out[t] = h

    w_em_masked = params["w_em"] * params["emission_mask"]
    z_prev = jnp.broadcast_to(params["z_q_0"], (B, L))
    xs = []
    for t in range(T):
        h_comb = 0.5 * (jnp.tanh(z_prev @ params["w_zh"].T + params["b_zh"])
                        + rnn_out[t])
        z_loc = h_comb @ params["w_hl"].T + params["b_hl"]
        x_loc = z_loc @ w_em_masked.T + params["b_em"]
        xs.append(x_loc)
        z_prev = z_loc
    x_loc_all = jnp.stack(xs, axis=1)                       # (B, T, D)

    x_scale = jnp.exp(0.5 * params["log_sigmas"])
    recon, scales = [], []
    ctr = 0
    for i, d in enumerate(obs_dims):
        recon.append(x_loc_all[:, :, ctr:ctr + d])
        scales.append(jnp.broadcast_to(x_scale[i], (B, T, d)))
        ctr += d
    return recon, scales


# ----------------------------------------------------------------------------
# Deterministic parameter construction (shapes mirror the torch module)
# ----------------------------------------------------------------------------
def _uniform(key, shape, fan_in):
    bound = 1.0 / np.sqrt(fan_in)
    return jax.random.uniform(key, shape, jnp.float32, -bound, bound)


def make_params(obs_dims, latent_dims, rnn_dim, key):
    D = sum(obs_dims)
    L = sum(latent_dims)
    shared = latent_dims[0]
    individual = latent_dims[1:]
    ks = jax.random.split(key, 12)

    # emission mask (as in LinearEmission.__init__)
    mask = np.zeros((D, L), dtype=np.float32)
    start_i = 0
    for i, dim_x in enumerate(obs_dims):
        mask[start_i:start_i + dim_x, 0:shared] = 1.0
        start_j = shared + sum(individual[:i])
        mask[start_i:start_i + dim_x, start_j:start_j + individual[i]] = 1.0
        start_i += dim_x

    params = {
        # nn.RNN (relu)
        "w_ih": _uniform(ks[0], (rnn_dim, D), rnn_dim),
        "w_hh": _uniform(ks[1], (rnn_dim, rnn_dim), rnn_dim),
        "b_ih": _uniform(ks[2], (rnn_dim,), rnn_dim),
        "b_hh": _uniform(ks[3], (rnn_dim,), rnn_dim),
        # Combiner
        "w_zh": _uniform(ks[4], (rnn_dim, L), L),
        "b_zh": _uniform(ks[5], (rnn_dim,), L),
        "w_hl": _uniform(ks[6], (L, rnn_dim), rnn_dim),
        "b_hl": _uniform(ks[7], (L,), rnn_dim),
        # LinearEmission
        "w_em": _uniform(ks[8], (D, L), L),
        "b_em": _uniform(ks[9], (D,), L),
        "emission_mask": jnp.asarray(mask),
        # DPCCA params (torch inits these to zeros)
        "log_sigmas": jnp.zeros((len(obs_dims),), jnp.float32),
        "z_q_0": jnp.zeros((L,), jnp.float32),
        "h_0": jnp.zeros((rnn_dim,), jnp.float32),
    }
    return params


# ----------------------------------------------------------------------------
if __name__ == "__main__":
    obs_dims = (6, 5)
    latent_dims = (3, 2, 2)
    rnn_dim = 10
    B, T = 2, 8

    key = jax.random.PRNGKey(0)
    k_p, k_x1, k_x2 = jax.random.split(key, 3)
    params = make_params(obs_dims, latent_dims, rnn_dim, k_p)

    mini_batch_list = [
        jax.random.normal(k_x1, (B, T, obs_dims[0]), jnp.float32),
        jax.random.normal(k_x2, (B, T, obs_dims[1]), jnp.float32),
    ]

    recon, scales = dpcca_forward(params, mini_batch_list,
                                  obs_dims, latent_dims, rnn_dim)
    recon = [jax.block_until_ready(r) for r in recon]
    scales = [jax.block_until_ready(s) for s in scales]

    recon_ref, scales_ref = dpcca_reference(params, mini_batch_list,
                                            obs_dims, latent_dims, rnn_dim)
    # bf16 matmul operands (f32 accumulation/state) -> relaxed tolerance
    for r, rr in zip(recon, recon_ref):
        np.testing.assert_allclose(np.asarray(r), np.asarray(rr),
                                   rtol=5e-2, atol=5e-2)
    for s, sr in zip(scales, scales_ref):
        np.testing.assert_allclose(np.asarray(s), np.asarray(sr),
                                   rtol=1e-6, atol=1e-6)

    print("KERNEL_OK")
</pallas_src>

<mosaic_0001>
module attributes {stable_mosaic.version = 11 : i64} {
  func.func @_dpcca_kernel(%arg0: i32, %arg1: memref<8x8x16xf32, #tpu.memory_space<vmem>>, %arg2: memref<16x128xf32, #tpu.memory_space<vmem>>, %arg3: memref<128x128xbf16, #tpu.memory_space<vmem>>, %arg4: memref<1x128xf32, #tpu.memory_space<vmem>>, %arg5: memref<1x128xf32, #tpu.memory_space<vmem>>, %arg6: memref<1x128xf32, #tpu.memory_space<vmem>>, %arg7: memref<128x128xbf16, #tpu.memory_space<vmem>>, %arg8: memref<1x128xf32, #tpu.memory_space<vmem>>, %arg9: memref<128x128xbf16, #tpu.memory_space<vmem>>, %arg10: memref<1x128xf32, #tpu.memory_space<vmem>>, %arg11: memref<128x128xbf16, #tpu.memory_space<vmem>>, %arg12: memref<1x128xf32, #tpu.memory_space<vmem>>, %arg13: memref<8x8x128xf32, #tpu.memory_space<vmem>>, %arg14: memref<8x8x128xf32, #tpu.memory_space<vmem>>) attributes {dimension_semantics = [#tpu.dimension_semantics<parallel>], iteration_bounds = array<i64: 1>, scalar_prefetch = 0 : i64, scratch_operands = 1 : i64, tpu.core_type = #tpu.core_type<tc>, window_params = [{transform_indices = @transform_0, window_bounds = array<i64: 8, 8, 16>}, {pipeline_mode = #tpu.pipeline_mode<synchronous>, transform_indices = @transform_1, window_bounds = array<i64: 16, 128>}, {pipeline_mode = #tpu.pipeline_mode<synchronous>, transform_indices = @transform_2, window_bounds = array<i64: 128, 128>}, {pipeline_mode = #tpu.pipeline_mode<synchronous>, transform_indices = @transform_3, window_bounds = array<i64: 1, 128>}, {pipeline_mode = #tpu.pipeline_mode<synchronous>, transform_indices = @transform_4, window_bounds = array<i64: 1, 128>}, {pipeline_mode = #tpu.pipeline_mode<synchronous>, transform_indices = @transform_5, window_bounds = array<i64: 1, 128>}, {pipeline_mode = #tpu.pipeline_mode<synchronous>, transform_indices = @transform_6, window_bounds = array<i64: 128, 128>}, {pipeline_mode = #tpu.pipeline_mode<synchronous>, transform_indices = @transform_7, window_bounds = array<i64: 1, 128>}, {pipeline_mode = #tpu.pipeline_mode<synchronous>, transform_indices = @transform_8, window_bounds = array<i64: 128, 128>}, {pipeline_mode = #tpu.pipeline_mode<synchronous>, transform_indices = @transform_9, window_bounds = array<i64: 1, 128>}, {pipeline_mode = #tpu.pipeline_mode<synchronous>, transform_indices = @transform_10, window_bounds = array<i64: 128, 128>}, {pipeline_mode = #tpu.pipeline_mode<synchronous>, transform_indices = @transform_11, window_bounds = array<i64: 1, 128>}, {transform_indices = @transform_12, window_bounds = array<i64: 8, 8, 128>}]} {
    %c0 = arith.constant 0 : index
    %c0_0 = arith.constant 0 : index
    %c0_1 = arith.constant 0 : index
    %0 = vector.load %arg1[%c0, %c0_0, %c0_1] : memref<8x8x16xf32, #tpu.memory_space<vmem>>, vector<8x8x16xf32>
    %1 = vector.shape_cast %0 : vector<8x8x16xf32> to vector<64x16xf32>
    %c0_2 = arith.constant 0 : index
    %c0_3 = arith.constant 0 : index
    %2 = vector.load %arg2[%c0_2, %c0_3] : memref<16x128xf32, #tpu.memory_space<vmem>>, vector<16x128xf32>
    %cst = arith.constant dense<0.000000e+00> : vector<64x128xf32>
    %3 = tpu.matmul %1, %2, %cst {dimension_numbers = #tpu.dot_dimension_numbers<[1], [0], [0], [1], [0, 0, 1, 1], [], []>} : vector<64x16xf32>, vector<16x128xf32>, vector<64x128xf32> -> vector<64x128xf32>
    %c0_4 = arith.constant 0 : index
    %c0_5 = arith.constant 0 : index
    %4 = vector.load %arg4[%c0_4, %c0_5] : memref<1x128xf32, #tpu.memory_space<vmem>>, vector<1x128xf32>
    %5 = vector.broadcast %4 : vector<1x128xf32> to vector<64x128xf32>
    %6 = arith.addf %3, %5 : vector<64x128xf32>
    %7 = vector.shape_cast %6 : vector<64x128xf32> to vector<8x8x128xf32>
    %c0_6 = arith.constant 0 : index
    %c0_7 = arith.constant 0 : index
    %c0_8 = arith.constant 0 : index
    %8 = vector.load %arg14[%c0_6, %c0_7, %c0_8] : memref<8x8x128xf32, #tpu.memory_space<vmem>>, vector<8x8x128xf32>
    tpu.vector_store %arg14[%c0_6, %c0_7, %c0_8], %7 {strides = array<i32>} : memref<8x8x128xf32, #tpu.memory_space<vmem>>, vector<8x8x128xf32>,
    %c0_9 = arith.constant 0 : index
    %c0_10 = arith.constant 0 : index
    %9 = vector.load %arg3[%c0_9, %c0_10] : memref<128x128xbf16, #tpu.memory_space<vmem>>, vector<128x128xbf16>
    %c0_11 = arith.constant 0 : index
    %c0_12 = arith.constant 0 : index
    %10 = vector.load %arg5[%c0_11, %c0_12] : memref<1x128xf32, #tpu.memory_space<vmem>>, vector<1x128xf32>
    %11 = vector.shape_cast %10 : vector<1x128xf32> to vector<1x128xf32>
    %12 = vector.broadcast %11 : vector<1x128xf32> to vector<8x128xf32>
    %c0_i32 = arith.constant 0 : i32
    %c7_i32 = arith.constant 7 : i32
    %13 = arith.subi %c7_i32, %c0_i32 : i32
    %14 = arith.index_cast %13 : i32 to index
    %c0_13 = arith.constant 0 : index
    %c0_14 = arith.constant 0 : index
    %15 = vector.load %arg14[%14, %c0_13, %c0_14] : memref<8x8x128xf32, #tpu.memory_space<vmem>>, vector<1x8x128xf32>
    %16 = vector.shape_cast %15 : vector<1x8x128xf32> to vector<8x128xf32>
    %17 = arith.truncf %12 : vector<8x128xf32> to vector<8x128xbf16>
    %cst_15 = arith.constant dense<0.000000e+00> : vector<8x128xf32>
    %18 = tpu.matmul %17, %9, %cst_15 {dimension_numbers = #tpu.dot_dimension_numbers<[1], [0], [0], [1], [0, 0, 1, 1], [], []>} : vector<8x128xbf16>, vector<128x128xbf16>, vector<8x128xf32> -> vector<8x128xf32>
    %19 = arith.addf %16, %18 : vector<8x128xf32>
    %cst_16 = arith.constant 0.000000e+00 : f32
    %20 = vector.broadcast %cst_16 : f32 to vector<8x128xf32>
    %21 = arith.maximumf %19, %20 : vector<8x128xf32>
    %22 = arith.index_cast %13 : i32 to index
    %c0_17 = arith.constant 0 : index
    %c0_18 = arith.constant 0 : index
    %23 = vector.load %arg14[%22, %c0_17, %c0_18] : memref<8x8x128xf32, #tpu.memory_space<vmem>>, vector<1x8x128xf32>
    %24 = vector.shape_cast %23 : vector<1x8x128xf32> to vector<8x128xf32>
    %25 = vector.shape_cast %21 : vector<8x128xf32> to vector<1x8x128xf32>
    tpu.vector_store %arg14[%22, %c0_17, %c0_18], %25 {strides = array<i32>} : memref<8x8x128xf32, #tpu.memory_space<vmem>>, vector<1x8x128xf32>,
    %c1_i32 = arith.constant 1 : i32
    %c7_i32_19 = arith.constant 7 : i32
    %26 = arith.subi %c7_i32_19, %c1_i32 : i32
    %27 = arith.index_cast %26 : i32 to index
    %c0_20 = arith.constant 0 : index
    %c0_21 = arith.constant 0 : index
    %28 = vector.load %arg14[%27, %c0_20, %c0_21] : memref<8x8x128xf32, #tpu.memory_space<vmem>>, vector<1x8x128xf32>
    %29 = vector.shape_cast %28 : vector<1x8x128xf32> to vector<8x128xf32>
    %30 = arith.truncf %21 : vector<8x128xf32> to vector<8x128xbf16>
    %cst_22 = arith.constant dense<0.000000e+00> : vector<8x128xf32>
    %31 = tpu.matmul %30, %9, %cst_22 {dimension_numbers = #tpu.dot_dimension_numbers<[1], [0], [0], [1], [0, 0, 1, 1], [], []>} : vector<8x128xbf16>, vector<128x128xbf16>, vector<8x128xf32> -> vector<8x128xf32>
    %32 = arith.addf %29, %31 : vector<8x128xf32>
    %cst_23 = arith.constant 0.000000e+00 : f32
    %33 = vector.broadcast %cst_23 : f32 to vector<8x128xf32>
    %34 = arith.maximumf %32, %33 : vector<8x128xf32>
    %35 = arith.index_cast %26 : i32 to index
    %c0_24 = arith.constant 0 : index
    %c0_25 = arith.constant 0 : index
    %36 = vector.load %arg14[%35, %c0_24, %c0_25] : memref<8x8x128xf32, #tpu.memory_space<vmem>>, vector<1x8x128xf32>
    %37 = vector.shape_cast %36 : vector<1x8x128xf32> to vector<8x128xf32>
    %38 = vector.shape_cast %34 : vector<8x128xf32> to vector<1x8x128xf32>
    tpu.vector_store %arg14[%35, %c0_24, %c0_25], %38 {strides = array<i32>} : memref<8x8x128xf32, #tpu.memory_space<vmem>>, vector<1x8x128xf32>,
    %c2_i32 = arith.constant 2 : i32
    %c7_i32_26 = arith.constant 7 : i32
    %39 = arith.subi %c7_i32_26, %c2_i32 : i32
    %40 = arith.index_cast %39 : i32 to index
    %c0_27 = arith.constant 0 : index
    %c0_28 = arith.constant 0 : index
    %41 = vector.load %arg14[%40, %c0_27, %c0_28] : memref<8x8x128xf32, #tpu.memory_space<vmem>>, vector<1x8x128xf32>
    %42 = vector.shape_cast %41 : vector<1x8x128xf32> to vector<8x128xf32>
    %43 = arith.truncf %34 : vector<8x128xf32> to vector<8x128xbf16>
    %cst_29 = arith.constant dense<0.000000e+00> : vector<8x128xf32>
    %44 = tpu.matmul %43, %9, %cst_29 {dimension_numbers = #tpu.dot_dimension_numbers<[1], [0], [0], [1], [0, 0, 1, 1], [], []>} : vector<8x128xbf16>, vector<128x128xbf16>, vector<8x128xf32> -> vector<8x128xf32>
    %45 = arith.addf %42, %44 : vector<8x128xf32>
    %cst_30 = arith.constant 0.000000e+00 : f32
    %46 = vector.broadcast %cst_30 : f32 to vector<8x128xf32>
    %47 = arith.maximumf %45, %46 : vector<8x128xf32>
    %48 = arith.index_cast %39 : i32 to index
    %c0_31 = arith.constant 0 : index
    %c0_32 = arith.constant 0 : index
    %49 = vector.load %arg14[%48, %c0_31, %c0_32] : memref<8x8x128xf32, #tpu.memory_space<vmem>>, vector<1x8x128xf32>
    %50 = vector.shape_cast %49 : vector<1x8x128xf32> to vector<8x128xf32>
    %51 = vector.shape_cast %47 : vector<8x128xf32> to vector<1x8x128xf32>
    tpu.vector_store %arg14[%48, %c0_31, %c0_32], %51 {strides = array<i32>} : memref<8x8x128xf32, #tpu.memory_space<vmem>>, vector<1x8x128xf32>,
    %c3_i32 = arith.constant 3 : i32
    %c7_i32_33 = arith.constant 7 : i32
    %52 = arith.subi %c7_i32_33, %c3_i32 : i32
    %53 = arith.index_cast %52 : i32 to index
    %c0_34 = arith.constant 0 : index
    %c0_35 = arith.constant 0 : index
    %54 = vector.load %arg14[%53, %c0_34, %c0_35] : memref<8x8x128xf32, #tpu.memory_space<vmem>>, vector<1x8x128xf32>
    %55 = vector.shape_cast %54 : vector<1x8x128xf32> to vector<8x128xf32>
    %56 = arith.truncf %47 : vector<8x128xf32> to vector<8x128xbf16>
    %cst_36 = arith.constant dense<0.000000e+00> : vector<8x128xf32>
    %57 = tpu.matmul %56, %9, %cst_36 {dimension_numbers = #tpu.dot_dimension_numbers<[1], [0], [0], [1], [0, 0, 1, 1], [], []>} : vector<8x128xbf16>, vector<128x128xbf16>, vector<8x128xf32> -> vector<8x128xf32>
    %58 = arith.addf %55, %57 : vector<8x128xf32>
    %cst_37 = arith.constant 0.000000e+00 : f32
    %59 = vector.broadcast %cst_37 : f32 to vector<8x128xf32>
    %60 = arith.maximumf %58, %59 : vector<8x128xf32>
    %61 = arith.index_cast %52 : i32 to index
    %c0_38 = arith.constant 0 : index
    %c0_39 = arith.constant 0 : index
    %62 = vector.load %arg14[%61, %c0_38, %c0_39] : memref<8x8x128xf32, #tpu.memory_space<vmem>>, vector<1x8x128xf32>
    %63 = vector.shape_cast %62 : vector<1x8x128xf32> to vector<8x128xf32>
    %64 = vector.shape_cast %60 : vector<8x128xf32> to vector<1x8x128xf32>
    tpu.vector_store %arg14[%61, %c0_38, %c0_39], %64 {strides = array<i32>} : memref<8x8x128xf32, #tpu.memory_space<vmem>>, vector<1x8x128xf32>,
    %c4_i32 = arith.constant 4 : i32
    %c7_i32_40 = arith.constant 7 : i32
    %65 = arith.subi %c7_i32_40, %c4_i32 : i32
    %66 = arith.index_cast %65 : i32 to index
    %c0_41 = arith.constant 0 : index
    %c0_42 = arith.constant 0 : index
    %67 = vector.load %arg14[%66, %c0_41, %c0_42] : memref<8x8x128xf32, #tpu.memory_space<vmem>>, vector<1x8x128xf32>
    %68 = vector.shape_cast %67 : vector<1x8x128xf32> to vector<8x128xf32>
    %69 = arith.truncf %60 : vector<8x128xf32> to vector<8x128xbf16>
    %cst_43 = arith.constant dense<0.000000e+00> : vector<8x128xf32>
    %70 = tpu.matmul %69, %9, %cst_43 {dimension_numbers = #tpu.dot_dimension_numbers<[1], [0], [0], [1], [0, 0, 1, 1], [], []>} : vector<8x128xbf16>, vector<128x128xbf16>, vector<8x128xf32> -> vector<8x128xf32>
    %71 = arith.addf %68, %70 : vector<8x128xf32>
    %cst_44 = arith.constant 0.000000e+00 : f32
    %72 = vector.broadcast %cst_44 : f32 to vector<8x128xf32>
    %73 = arith.maximumf %71, %72 : vector<8x128xf32>
    %74 = arith.index_cast %65 : i32 to index
    %c0_45 = arith.constant 0 : index
    %c0_46 = arith.constant 0 : index
    %75 = vector.load %arg14[%74, %c0_45, %c0_46] : memref<8x8x128xf32, #tpu.memory_space<vmem>>, vector<1x8x128xf32>
    %76 = vector.shape_cast %75 : vector<1x8x128xf32> to vector<8x128xf32>
    %77 = vector.shape_cast %73 : vector<8x128xf32> to vector<1x8x128xf32>
    tpu.vector_store %arg14[%74, %c0_45, %c0_46], %77 {strides = array<i32>} : memref<8x8x128xf32, #tpu.memory_space<vmem>>, vector<1x8x128xf32>,
    %c5_i32 = arith.constant 5 : i32
    %c7_i32_47 = arith.constant 7 : i32
    %78 = arith.subi %c7_i32_47, %c5_i32 : i32
    %79 = arith.index_cast %78 : i32 to index
    %c0_48 = arith.constant 0 : index
    %c0_49 = arith.constant 0 : index
    %80 = vector.load %arg14[%79, %c0_48, %c0_49] : memref<8x8x128xf32, #tpu.memory_space<vmem>>, vector<1x8x128xf32>
    %81 = vector.shape_cast %80 : vector<1x8x128xf32> to vector<8x128xf32>
    %82 = arith.truncf %73 : vector<8x128xf32> to vector<8x128xbf16>
    %cst_50 = arith.constant dense<0.000000e+00> : vector<8x128xf32>
    %83 = tpu.matmul %82, %9, %cst_50 {dimension_numbers = #tpu.dot_dimension_numbers<[1], [0], [0], [1], [0, 0, 1, 1], [], []>} : vector<8x128xbf16>, vector<128x128xbf16>, vector<8x128xf32> -> vector<8x128xf32>
    %84 = arith.addf %81, %83 : vector<8x128xf32>
    %cst_51 = arith.constant 0.000000e+00 : f32
    %85 = vector.broadcast %cst_51 : f32 to vector<8x128xf32>
    %86 = arith.maximumf %84, %85 : vector<8x128xf32>
    %87 = arith.index_cast %78 : i32 to index
    %c0_52 = arith.constant 0 : index
    %c0_53 = arith.constant 0 : index
    %88 = vector.load %arg14[%87, %c0_52, %c0_53] : memref<8x8x128xf32, #tpu.memory_space<vmem>>, vector<1x8x128xf32>
    %89 = vector.shape_cast %88 : vector<1x8x128xf32> to vector<8x128xf32>
    %90 = vector.shape_cast %86 : vector<8x128xf32> to vector<1x8x128xf32>
    tpu.vector_store %arg14[%87, %c0_52, %c0_53], %90 {strides = array<i32>} : memref<8x8x128xf32, #tpu.memory_space<vmem>>, vector<1x8x128xf32>,
    %c6_i32 = arith.constant 6 : i32
    %c7_i32_54 = arith.constant 7 : i32
    %91 = arith.subi %c7_i32_54, %c6_i32 : i32
    %92 = arith.index_cast %91 : i32 to index
    %c0_55 = arith.constant 0 : index
    %c0_56 = arith.constant 0 : index
    %93 = vector.load %arg14[%92, %c0_55, %c0_56] : memref<8x8x128xf32, #tpu.memory_space<vmem>>, vector<1x8x128xf32>
    %94 = vector.shape_cast %93 : vector<1x8x128xf32> to vector<8x128xf32>
    %95 = arith.truncf %86 : vector<8x128xf32> to vector<8x128xbf16>
    %cst_57 = arith.constant dense<0.000000e+00> : vector<8x128xf32>
    %96 = tpu.matmul %95, %9, %cst_57 {dimension_numbers = #tpu.dot_dimension_numbers<[1], [0], [0], [1], [0, 0, 1, 1], [], []>} : vector<8x128xbf16>, vector<128x128xbf16>, vector<8x128xf32> -> vector<8x128xf32>
    %97 = arith.addf %94, %96 : vector<8x128xf32>
    %cst_58 = arith.constant 0.000000e+00 : f32
    %98 = vector.broadcast %cst_58 : f32 to vector<8x128xf32>
    %99 = arith.maximumf %97, %98 : vector<8x128xf32>
    %100 = arith.index_cast %91 : i32 to index
    %c0_59 = arith.constant 0 : index
    %c0_60 = arith.constant 0 : index
    %101 = vector.load %arg14[%100, %c0_59, %c0_60] : memref<8x8x128xf32, #tpu.memory_space<vmem>>, vector<1x8x128xf32>
    %102 = vector.shape_cast %101 : vector<1x8x128xf32> to vector<8x128xf32>
    %103 = vector.shape_cast %99 : vector<8x128xf32> to vector<1x8x128xf32>
    tpu.vector_store %arg14[%100, %c0_59, %c0_60], %103 {strides = array<i32>} : memref<8x8x128xf32, #tpu.memory_space<vmem>>, vector<1x8x128xf32>,
    %c7_i32_61 = arith.constant 7 : i32
    %c7_i32_62 = arith.constant 7 : i32
    %104 = arith.subi %c7_i32_62, %c7_i32_61 : i32
    %105 = arith.index_cast %104 : i32 to index
    %c0_63 = arith.constant 0 : index
    %c0_64 = arith.constant 0 : index
    %106 = vector.load %arg14[%105, %c0_63, %c0_64] : memref<8x8x128xf32, #tpu.memory_space<vmem>>, vector<1x8x128xf32>
    %107 = vector.shape_cast %106 : vector<1x8x128xf32> to vector<8x128xf32>
    %108 = arith.truncf %99 : vector<8x128xf32> to vector<8x128xbf16>
    %cst_65 = arith.constant dense<0.000000e+00> : vector<8x128xf32>
    %109 = tpu.matmul %108, %9, %cst_65 {dimension_numbers = #tpu.dot_dimension_numbers<[1], [0], [0], [1], [0, 0, 1, 1], [], []>} : vector<8x128xbf16>, vector<128x128xbf16>, vector<8x128xf32> -> vector<8x128xf32>
    %110 = arith.addf %107, %109 : vector<8x128xf32>
    %cst_66 = arith.constant 0.000000e+00 : f32
    %111 = vector.broadcast %cst_66 : f32 to vector<8x128xf32>
    %112 = arith.maximumf %110, %111 : vector<8x128xf32>
    %113 = arith.index_cast %104 : i32 to index
    %c0_67 = arith.constant 0 : index
    %c0_68 = arith.constant 0 : index
    %114 = vector.load %arg14[%113, %c0_67, %c0_68] : memref<8x8x128xf32, #tpu.memory_space<vmem>>, vector<1x8x128xf32>
    %115 = vector.shape_cast %114 : vector<1x8x128xf32> to vector<8x128xf32>
    %116 = vector.shape_cast %112 : vector<8x128xf32> to vector<1x8x128xf32>
    tpu.vector_store %arg14[%113, %c0_67, %c0_68], %116 {strides = array<i32>} : memref<8x8x128xf32, #tpu.memory_space<vmem>>, vector<1x8x128xf32>,
    %c8_i32 = arith.constant 8 : i32
    %c0_69 = arith.constant 0 : index
    %c0_70 = arith.constant 0 : index
    %117 = vector.load %arg7[%c0_69, %c0_70] : memref<128x128xbf16, #tpu.memory_space<vmem>>, vector<128x128xbf16>
    %c0_71 = arith.constant 0 : index
    %c0_72 = arith.constant 0 : index
    %118 = vector.load %arg9[%c0_71, %c0_72] : memref<128x128xbf16, #tpu.memory_space<vmem>>, vector<128x128xbf16>
    %c0_73 = arith.constant 0 : index
    %c0_74 = arith.constant 0 : index
    %119 = vector.load %arg8[%c0_73, %c0_74] : memref<1x128xf32, #tpu.memory_space<vmem>>, vector<1x128xf32>
    %120 = vector.shape_cast %119 : vector<1x128xf32> to vector<1x128xf32>
    %121 = vector.broadcast %120 : vector<1x128xf32> to vector<8x128xf32>
    %c0_75 = arith.constant 0 : index
    %c0_76 = arith.constant 0 : index
    %122 = vector.load %arg10[%c0_75, %c0_76] : memref<1x128xf32, #tpu.memory_space<vmem>>, vector<1x128xf32>
    %123 = vector.shape_cast %122 : vector<1x128xf32> to vector<1x128xf32>
    %124 = vector.broadcast %123 : vector<1x128xf32> to vector<8x128xf32>
    %c0_77 = arith.constant 0 : index
    %c0_78 = arith.constant 0 : index
    %125 = vector.load %arg6[%c0_77, %c0_78] : memref<1x128xf32, #tpu.memory_space<vmem>>, vector<1x128xf32>
    %126 = vector.shape_cast %125 : vector<1x128xf32> to vector<1x128xf32>
    %127 = vector.broadcast %126 : vector<1x128xf32> to vector<8x128xf32>
    %c0_i32_79 = arith.constant 0 : i32
    %128 = arith.truncf %127 : vector<8x128xf32> to vector<8x128xbf16>
    %cst_80 = arith.constant dense<0.000000e+00> : vector<8x128xf32>
    %129 = tpu.matmul %128, %117, %cst_80 {dimension_numbers = #tpu.dot_dimension_numbers<[1], [0], [0], [1], [0, 0, 1, 1], [], []>} : vector<8x128xbf16>, vector<128x128xbf16>, vector<8x128xf32> -> vector<8x128xf32>
    %130 = arith.addf %129, %121 : vector<8x128xf32>
    %131 = math.tanh %130 : vector<8x128xf32>
    %132 = arith.index_cast %c0_i32_79 : i32 to index
    %c0_81 = arith.constant 0 : index
    %c0_82 = arith.constant 0 : index
    %133 = vector.load %arg14[%132, %c0_81, %c0_82] : memref<8x8x128xf32, #tpu.memory_space<vmem>>, vector<1x8x128xf32>
    %134 = vector.shape_cast %133 : vector<1x8x128xf32> to vector<8x128xf32>
    %135 = arith.addf %131, %134 : vector<8x128xf32>
    %cst_83 = arith.constant 5.000000e-01 : f32
    %136 = vector.broadcast %cst_83 : f32 to vector<8x128xf32>
    %137 = arith.mulf %136, %135 : vector<8x128xf32>
    %138 = arith.truncf %137 : vector<8x128xf32> to vector<8x128xbf16>
    %cst_84 = arith.constant dense<0.000000e+00> : vector<8x128xf32>
    %139 = tpu.matmul %138, %118, %cst_84 {dimension_numbers = #tpu.dot_dimension_numbers<[1], [0], [0], [1], [0, 0, 1, 1], [], []>} : vector<8x128xbf16>, vector<128x128xbf16>, vector<8x128xf32> -> vector<8x128xf32>
    %140 = arith.addf %139, %124 : vector<8x128xf32>
    %141 = arith.index_cast %c0_i32_79 : i32 to index
    %c0_85 = arith.constant 0 : index
    %c0_86 = arith.constant 0 : index
    %142 = vector.load %arg14[%141, %c0_85, %c0_86] : memref<8x8x128xf32, #tpu.memory_space<vmem>>, vector<1x8x128xf32>
    %143 = vector.shape_cast %142 : vector<1x8x128xf32> to vector<8x128xf32>
    %144 = vector.shape_cast %140 : vector<8x128xf32> to vector<1x8x128xf32>
    tpu.vector_store %arg14[%141, %c0_85, %c0_86], %144 {strides = array<i32>} : memref<8x8x128xf32, #tpu.memory_space<vmem>>, vector<1x8x128xf32>,
    %c1_i32_87 = arith.constant 1 : i32
    %145 = arith.truncf %140 : vector<8x128xf32> to vector<8x128xbf16>
    %cst_88 = arith.constant dense<0.000000e+00> : vector<8x128xf32>
    %146 = tpu.matmul %145, %117, %cst_88 {dimension_numbers = #tpu.dot_dimension_numbers<[1], [0], [0], [1], [0, 0, 1, 1], [], []>} : vector<8x128xbf16>, vector<128x128xbf16>, vector<8x128xf32> -> vector<8x128xf32>
    %147 = arith.addf %146, %121 : vector<8x128xf32>
    %148 = math.tanh %147 : vector<8x128xf32>
    %149 = arith.index_cast %c1_i32_87 : i32 to index
    %c0_89 = arith.constant 0 : index
    %c0_90 = arith.constant 0 : index
    %150 = vector.load %arg14[%149, %c0_89, %c0_90] : memref<8x8x128xf32, #tpu.memory_space<vmem>>, vector<1x8x128xf32>
    %151 = vector.shape_cast %150 : vector<1x8x128xf32> to vector<8x128xf32>
    %152 = arith.addf %148, %151 : vector<8x128xf32>
    %cst_91 = arith.constant 5.000000e-01 : f32
    %153 = vector.broadcast %cst_91 : f32 to vector<8x128xf32>
    %154 = arith.mulf %153, %152 : vector<8x128xf32>
    %155 = arith.truncf %154 : vector<8x128xf32> to vector<8x128xbf16>
    %cst_92 = arith.constant dense<0.000000e+00> : vector<8x128xf32>
    %156 = tpu.matmul %155, %118, %cst_92 {dimension_numbers = #tpu.dot_dimension_numbers<[1], [0], [0], [1], [0, 0, 1, 1], [], []>} : vector<8x128xbf16>, vector<128x128xbf16>, vector<8x128xf32> -> vector<8x128xf32>
    %157 = arith.addf %156, %124 : vector<8x128xf32>
    %158 = arith.index_cast %c1_i32_87 : i32 to index
    %c0_93 = arith.constant 0 : index
    %c0_94 = arith.constant 0 : index
    %159 = vector.load %arg14[%158, %c0_93, %c0_94] : memref<8x8x128xf32, #tpu.memory_space<vmem>>, vector<1x8x128xf32>
    %160 = vector.shape_cast %159 : vector<1x8x128xf32> to vector<8x128xf32>
    %161 = vector.shape_cast %157 : vector<8x128xf32> to vector<1x8x128xf32>
    tpu.vector_store %arg14[%158, %c0_93, %c0_94], %161 {strides = array<i32>} : memref<8x8x128xf32, #tpu.memory_space<vmem>>, vector<1x8x128xf32>,
    %c2_i32_95 = arith.constant 2 : i32
    %162 = arith.truncf %157 : vector<8x128xf32> to vector<8x128xbf16>
    %cst_96 = arith.constant dense<0.000000e+00> : vector<8x128xf32>
    %163 = tpu.matmul %162, %117, %cst_96 {dimension_numbers = #tpu.dot_dimension_numbers<[1], [0], [0], [1], [0, 0, 1, 1], [], []>} : vector<8x128xbf16>, vector<128x128xbf16>, vector<8x128xf32> -> vector<8x128xf32>
    %164 = arith.addf %163, %121 : vector<8x128xf32>
    %165 = math.tanh %164 : vector<8x128xf32>
    %166 = arith.index_cast %c2_i32_95 : i32 to index
    %c0_97 = arith.constant 0 : index
    %c0_98 = arith.constant 0 : index
    %167 = vector.load %arg14[%166, %c0_97, %c0_98] : memref<8x8x128xf32, #tpu.memory_space<vmem>>, vector<1x8x128xf32>
    %168 = vector.shape_cast %167 : vector<1x8x128xf32> to vector<8x128xf32>
    %169 = arith.addf %165, %168 : vector<8x128xf32>
    %cst_99 = arith.constant 5.000000e-01 : f32
    %170 = vector.broadcast %cst_99 : f32 to vector<8x128xf32>
    %171 = arith.mulf %170, %169 : vector<8x128xf32>
    %172 = arith.truncf %171 : vector<8x128xf32> to vector<8x128xbf16>
    %cst_100 = arith.constant dense<0.000000e+00> : vector<8x128xf32>
    %173 = tpu.matmul %172, %118, %cst_100 {dimension_numbers = #tpu.dot_dimension_numbers<[1], [0], [0], [1], [0, 0, 1, 1], [], []>} : vector<8x128xbf16>, vector<128x128xbf16>, vector<8x128xf32> -> vector<8x128xf32>
    %174 = arith.addf %173, %124 : vector<8x128xf32>
    %175 = arith.index_cast %c2_i32_95 : i32 to index
    %c0_101 = arith.constant 0 : index
    %c0_102 = arith.constant 0 : index
    %176 = vector.load %arg14[%175, %c0_101, %c0_102] : memref<8x8x128xf32, #tpu.memory_space<vmem>>, vector<1x8x128xf32>
    %177 = vector.shape_cast %176 : vector<1x8x128xf32> to vector<8x128xf32>
    %178 = vector.shape_cast %174 : vector<8x128xf32> to vector<1x8x128xf32>
    tpu.vector_store %arg14[%175, %c0_101, %c0_102], %178 {strides = array<i32>} : memref<8x8x128xf32, #tpu.memory_space<vmem>>, vector<1x8x128xf32>,
    %c3_i32_103 = arith.constant 3 : i32
    %179 = arith.truncf %174 : vector<8x128xf32> to vector<8x128xbf16>
    %cst_104 = arith.constant dense<0.000000e+00> : vector<8x128xf32>
    %180 = tpu.matmul %179, %117, %cst_104 {dimension_numbers = #tpu.dot_dimension_numbers<[1], [0], [0], [1], [0, 0, 1, 1], [], []>} : vector<8x128xbf16>, vector<128x128xbf16>, vector<8x128xf32> -> vector<8x128xf32>
    %181 = arith.addf %180, %121 : vector<8x128xf32>
    %182 = math.tanh %181 : vector<8x128xf32>
    %183 = arith.index_cast %c3_i32_103 : i32 to index
    %c0_105 = arith.constant 0 : index
    %c0_106 = arith.constant 0 : index
    %184 = vector.load %arg14[%183, %c0_105, %c0_106] : memref<8x8x128xf32, #tpu.memory_space<vmem>>, vector<1x8x128xf32>
    %185 = vector.shape_cast %184 : vector<1x8x128xf32> to vector<8x128xf32>
    %186 = arith.addf %182, %185 : vector<8x128xf32>
    %cst_107 = arith.constant 5.000000e-01 : f32
    %187 = vector.broadcast %cst_107 : f32 to vector<8x128xf32>
    %188 = arith.mulf %187, %186 : vector<8x128xf32>
    %189 = arith.truncf %188 : vector<8x128xf32> to vector<8x128xbf16>
    %cst_108 = arith.constant dense<0.000000e+00> : vector<8x128xf32>
    %190 = tpu.matmul %189, %118, %cst_108 {dimension_numbers = #tpu.dot_dimension_numbers<[1], [0], [0], [1], [0, 0, 1, 1], [], []>} : vector<8x128xbf16>, vector<128x128xbf16>, vector<8x128xf32> -> vector<8x128xf32>
    %191 = arith.addf %190, %124 : vector<8x128xf32>
    %192 = arith.index_cast %c3_i32_103 : i32 to index
    %c0_109 = arith.constant 0 : index
    %c0_110 = arith.constant 0 : index
    %193 = vector.load %arg14[%192, %c0_109, %c0_110] : memref<8x8x128xf32, #tpu.memory_space<vmem>>, vector<1x8x128xf32>
    %194 = vector.shape_cast %193 : vector<1x8x128xf32> to vector<8x128xf32>
    %195 = vector.shape_cast %191 : vector<8x128xf32> to vector<1x8x128xf32>
    tpu.vector_store %arg14[%192, %c0_109, %c0_110], %195 {strides = array<i32>} : memref<8x8x128xf32, #tpu.memory_space<vmem>>, vector<1x8x128xf32>,
    %c4_i32_111 = arith.constant 4 : i32
    %196 = arith.truncf %191 : vector<8x128xf32> to vector<8x128xbf16>
    %cst_112 = arith.constant dense<0.000000e+00> : vector<8x128xf32>
    %197 = tpu.matmul %196, %117, %cst_112 {dimension_numbers = #tpu.dot_dimension_numbers<[1], [0], [0], [1], [0, 0, 1, 1], [], []>} : vector<8x128xbf16>, vector<128x128xbf16>, vector<8x128xf32> -> vector<8x128xf32>
    %198 = arith.addf %197, %121 : vector<8x128xf32>
    %199 = math.tanh %198 : vector<8x128xf32>
    %200 = arith.index_cast %c4_i32_111 : i32 to index
    %c0_113 = arith.constant 0 : index
    %c0_114 = arith.constant 0 : index
    %201 = vector.load %arg14[%200, %c0_113, %c0_114] : memref<8x8x128xf32, #tpu.memory_space<vmem>>, vector<1x8x128xf32>
    %202 = vector.shape_cast %201 : vector<1x8x128xf32> to vector<8x128xf32>
    %203 = arith.addf %199, %202 : vector<8x128xf32>
    %cst_115 = arith.constant 5.000000e-01 : f32
    %204 = vector.broadcast %cst_115 : f32 to vector<8x128xf32>
    %205 = arith.mulf %204, %203 : vector<8x128xf32>
    %206 = arith.truncf %205 : vector<8x128xf32> to vector<8x128xbf16>
    %cst_116 = arith.constant dense<0.000000e+00> : vector<8x128xf32>
    %207 = tpu.matmul %206, %118, %cst_116 {dimension_numbers = #tpu.dot_dimension_numbers<[1], [0], [0], [1], [0, 0, 1, 1], [], []>} : vector<8x128xbf16>, vector<128x128xbf16>, vector<8x128xf32> -> vector<8x128xf32>
    %208 = arith.addf %207, %124 : vector<8x128xf32>
    %209 = arith.index_cast %c4_i32_111 : i32 to index
    %c0_117 = arith.constant 0 : index
    %c0_118 = arith.constant 0 : index
    %210 = vector.load %arg14[%209, %c0_117, %c0_118] : memref<8x8x128xf32, #tpu.memory_space<vmem>>, vector<1x8x128xf32>
    %211 = vector.shape_cast %210 : vector<1x8x128xf32> to vector<8x128xf32>
    %212 = vector.shape_cast %208 : vector<8x128xf32> to vector<1x8x128xf32>
    tpu.vector_store %arg14[%209, %c0_117, %c0_118], %212 {strides = array<i32>} : memref<8x8x128xf32, #tpu.memory_space<vmem>>, vector<1x8x128xf32>,
    %c5_i32_119 = arith.constant 5 : i32
    %213 = arith.truncf %208 : vector<8x128xf32> to vector<8x128xbf16>
    %cst_120 = arith.constant dense<0.000000e+00> : vector<8x128xf32>
    %214 = tpu.matmul %213, %117, %cst_120 {dimension_numbers = #tpu.dot_dimension_numbers<[1], [0], [0], [1], [0, 0, 1, 1], [], []>} : vector<8x128xbf16>, vector<128x128xbf16>, vector<8x128xf32> -> vector<8x128xf32>
    %215 = arith.addf %214, %121 : vector<8x128xf32>
    %216 = math.tanh %215 : vector<8x128xf32>
    %217 = arith.index_cast %c5_i32_119 : i32 to index
    %c0_121 = arith.constant 0 : index
    %c0_122 = arith.constant 0 : index
    %218 = vector.load %arg14[%217, %c0_121, %c0_122] : memref<8x8x128xf32, #tpu.memory_space<vmem>>, vector<1x8x128xf32>
    %219 = vector.shape_cast %218 : vector<1x8x128xf32> to vector<8x128xf32>
    %220 = arith.addf %216, %219 : vector<8x128xf32>
    %cst_123 = arith.constant 5.000000e-01 : f32
    %221 = vector.broadcast %cst_123 : f32 to vector<8x128xf32>
    %222 = arith.mulf %221, %220 : vector<8x128xf32>
    %223 = arith.truncf %222 : vector<8x128xf32> to vector<8x128xbf16>
    %cst_124 = arith.constant dense<0.000000e+00> : vector<8x128xf32>
    %224 = tpu.matmul %223, %118, %cst_124 {dimension_numbers = #tpu.dot_dimension_numbers<[1], [0], [0], [1], [0, 0, 1, 1], [], []>} : vector<8x128xbf16>, vector<128x128xbf16>, vector<8x128xf32> -> vector<8x128xf32>
    %225 = arith.addf %224, %124 : vector<8x128xf32>
    %226 = arith.index_cast %c5_i32_119 : i32 to index
    %c0_125 = arith.constant 0 : index
    %c0_126 = arith.constant 0 : index
    %227 = vector.load %arg14[%226, %c0_125, %c0_126] : memref<8x8x128xf32, #tpu.memory_space<vmem>>, vector<1x8x128xf32>
    %228 = vector.shape_cast %227 : vector<1x8x128xf32> to vector<8x128xf32>
    %229 = vector.shape_cast %225 : vector<8x128xf32> to vector<1x8x128xf32>
    tpu.vector_store %arg14[%226, %c0_125, %c0_126], %229 {strides = array<i32>} : memref<8x8x128xf32, #tpu.memory_space<vmem>>, vector<1x8x128xf32>,
    %c6_i32_127 = arith.constant 6 : i32
    %230 = arith.truncf %225 : vector<8x128xf32> to vector<8x128xbf16>
    %cst_128 = arith.constant dense<0.000000e+00> : vector<8x128xf32>
    %231 = tpu.matmul %230, %117, %cst_128 {dimension_numbers = #tpu.dot_dimension_numbers<[1], [0], [0], [1], [0, 0, 1, 1], [], []>} : vector<8x128xbf16>, vector<128x128xbf16>, vector<8x128xf32> -> vector<8x128xf32>
    %232 = arith.addf %231, %121 : vector<8x128xf32>
    %233 = math.tanh %232 : vector<8x128xf32>
    %234 = arith.index_cast %c6_i32_127 : i32 to index
    %c0_129 = arith.constant 0 : index
    %c0_130 = arith.constant 0 : index
    %235 = vector.load %arg14[%234, %c0_129, %c0_130] : memref<8x8x128xf32, #tpu.memory_space<vmem>>, vector<1x8x128xf32>
    %236 = vector.shape_cast %235 : vector<1x8x128xf32> to vector<8x128xf32>
    %237 = arith.addf %233, %236 : vector<8x128xf32>
    %cst_131 = arith.constant 5.000000e-01 : f32
    %238 = vector.broadcast %cst_131 : f32 to vector<8x128xf32>
    %239 = arith.mulf %238, %237 : vector<8x128xf32>
    %240 = arith.truncf %239 : vector<8x128xf32> to vector<8x128xbf16>
    %cst_132 = arith.constant dense<0.000000e+00> : vector<8x128xf32>
    %241 = tpu.matmul %240, %118, %cst_132 {dimension_numbers = #tpu.dot_dimension_numbers<[1], [0], [0], [1], [0, 0, 1, 1], [], []>} : vector<8x128xbf16>, vector<128x128xbf16>, vector<8x128xf32> -> vector<8x128xf32>
    %242 = arith.addf %241, %124 : vector<8x128xf32>
    %243 = arith.index_cast %c6_i32_127 : i32 to index
    %c0_133 = arith.constant 0 : index
    %c0_134 = arith.constant 0 : index
    %244 = vector.load %arg14[%243, %c0_133, %c0_134] : memref<8x8x128xf32, #tpu.memory_space<vmem>>, vector<1x8x128xf32>
    %245 = vector.shape_cast %244 : vector<1x8x128xf32> to vector<8x128xf32>
    %246 = vector.shape_cast %242 : vector<8x128xf32> to vector<1x8x128xf32>
    tpu.vector_store %arg14[%243, %c0_133, %c0_134], %246 {strides = array<i32>} : memref<8x8x128xf32, #tpu.memory_space<vmem>>, vector<1x8x128xf32>,
    %c7_i32_135 = arith.constant 7 : i32
    %247 = arith.truncf %242 : vector<8x128xf32> to vector<8x128xbf16>
    %cst_136 = arith.constant dense<0.000000e+00> : vector<8x128xf32>
    %248 = tpu.matmul %247, %117, %cst_136 {dimension_numbers = #tpu.dot_dimension_numbers<[1], [0], [0], [1], [0, 0, 1, 1], [], []>} : vector<8x128xbf16>, vector<128x128xbf16>, vector<8x128xf32> -> vector<8x128xf32>
    %249 = arith.addf %248, %121 : vector<8x128xf32>
    %250 = math.tanh %249 : vector<8x128xf32>
    %251 = arith.index_cast %c7_i32_135 : i32 to index
    %c0_137 = arith.constant 0 : index
    %c0_138 = arith.constant 0 : index
    %252 = vector.load %arg14[%251, %c0_137, %c0_138] : memref<8x8x128xf32, #tpu.memory_space<vmem>>, vector<1x8x128xf32>
    %253 = vector.shape_cast %252 : vector<1x8x128xf32> to vector<8x128xf32>
    %254 = arith.addf %250, %253 : vector<8x128xf32>
    %cst_139 = arith.constant 5.000000e-01 : f32
    %255 = vector.broadcast %cst_139 : f32 to vector<8x128xf32>
    %256 = arith.mulf %255, %254 : vector<8x128xf32>
    %257 = arith.truncf %256 : vector<8x128xf32> to vector<8x128xbf16>
    %cst_140 = arith.constant dense<0.000000e+00> : vector<8x128xf32>
    %258 = tpu.matmul %257, %118, %cst_140 {dimension_numbers = #tpu.dot_dimension_numbers<[1], [0], [0], [1], [0, 0, 1, 1], [], []>} : vector<8x128xbf16>, vector<128x128xbf16>, vector<8x128xf32> -> vector<8x128xf32>
    %259 = arith.addf %258, %124 : vector<8x128xf32>
    %260 = arith.index_cast %c7_i32_135 : i32 to index
    %c0_141 = arith.constant 0 : index
    %c0_142 = arith.constant 0 : index
    %261 = vector.load %arg14[%260, %c0_141, %c0_142] : memref<8x8x128xf32, #tpu.memory_space<vmem>>, vector<1x8x128xf32>
    %262 = vector.shape_cast %261 : vector<1x8x128xf32> to vector<8x128xf32>
    %263 = vector.shape_cast %259 : vector<8x128xf32> to vector<1x8x128xf32>
    tpu.vector_store %arg14[%260, %c0_141, %c0_142], %263 {strides = array<i32>} : memref<8x8x128xf32, #tpu.memory_space<vmem>>, vector<1x8x128xf32>,
    %c8_i32_143 = arith.constant 8 : i32
    %c0_144 = arith.constant 0 : index
    %c0_145 = arith.constant 0 : index
    %c0_146 = arith.constant 0 : index
    %264 = vector.load %arg14[%c0_144, %c0_145, %c0_146] : memref<8x8x128xf32, #tpu.memory_space<vmem>>, vector<8x8x128xf32>
    %265 = vector.shape_cast %264 : vector<8x8x128xf32> to vector<64x128xf32>
    %266 = arith.truncf %265 : vector<64x128xf32> to vector<64x128xbf16>
    %c0_147 = arith.constant 0 : index
    %c0_148 = arith.constant 0 : index
    %267 = vector.load %arg11[%c0_147, %c0_148] : memref<128x128xbf16, #tpu.memory_space<vmem>>, vector<128x128xbf16>
    %cst_149 = arith.constant dense<0.000000e+00> : vector<64x128xf32>
    %268 = tpu.matmul %266, %267, %cst_149 {dimension_numbers = #tpu.dot_dimension_numbers<[1], [0], [0], [1], [0, 0, 1, 1], [], []>} : vector<64x128xbf16>, vector<128x128xbf16>, vector<64x128xf32> -> vector<64x128xf32>
    %c0_150 = arith.constant 0 : index
    %c0_151 = arith.constant 0 : index
    %269 = vector.load %arg12[%c0_150, %c0_151] : memref<1x128xf32, #tpu.memory_space<vmem>>, vector<1x128xf32>
    %270 = vector.broadcast %269 : vector<1x128xf32> to vector<64x128xf32>
    %271 = arith.addf %268, %270 : vector<64x128xf32>
    %272 = vector.shape_cast %271 : vector<64x128xf32> to vector<8x8x128xf32>
    %c0_152 = arith.constant 0 : index
    %c0_153 = arith.constant 0 : index
    %c0_154 = arith.constant 0 : index
    %273 = vector.load %arg13[%c0_152, %c0_153, %c0_154] : memref<8x8x128xf32, #tpu.memory_space<vmem>>, vector<8x8x128xf32>
    tpu.vector_store %arg13[%c0_152, %c0_153, %c0_154], %272 {strides = array<i32>} : memref<8x8x128xf32, #tpu.memory_space<vmem>>, vector<8x8x128xf32>,
    return
  }
  func.func @transform_0(%arg0: i32) -> (i32, i32, i32) {
    %c0_i32 = arith.constant 0 : i32
    %c0_i32_0 = arith.constant 0 : i32
    %c0_i32_1 = arith.constant 0 : i32
    return %c0_i32, %arg0, %c0_i32_0 : i32, i32, i32
  }
  func.func @transform_1(%arg0: i32) -> (i32, i32) {
    %c0_i32 = arith.constant 0 : i32
    %c0_i32_0 = arith.constant 0 : i32
    %c0_i32_1 = arith.constant 0 : i32
    return %c0_i32, %c0_i32_0 : i32, i32
  }
  func.func @transform_2(%arg0: i32) -> (i32, i32) {
    %c0_i32 = arith.constant 0 : i32
    %c0_i32_0 = arith.constant 0 : i32
    %c0_i32_1 = arith.constant 0 : i32
    return %c0_i32, %c0_i32_0 : i32, i32
  }
  func.func @transform_3(%arg0: i32) -> (i32, i32) {
    %c0_i32 = arith.constant 0 : i32
    %c0_i32_0 = arith.constant 0 : i32
    %c0_i32_1 = arith.constant 0 : i32
    return %c0_i32, %c0_i32_0 : i32, i32
  }
  func.func @transform_4(%arg0: i32) -> (i32, i32) {
    %c0_i32 = arith.constant 0 : i32
    %c0_i32_0 = arith.constant 0 : i32
    %c0_i32_1 = arith.constant 0 : i32
    return %c0_i32, %c0_i32_0 : i32, i32
  }
  func.func @transform_5(%arg0: i32) -> (i32, i32) {
    %c0_i32 = arith.constant 0 : i32
    %c0_i32_0 = arith.constant 0 : i32
    %c0_i32_1 = arith.constant 0 : i32
    return %c0_i32, %c0_i32_0 : i32, i32
  }
  func.func @transform_6(%arg0: i32) -> (i32, i32) {
    %c0_i32 = arith.constant 0 : i32
    %c0_i32_0 = arith.constant 0 : i32
    %c0_i32_1 = arith.constant 0 : i32
    return %c0_i32, %c0_i32_0 : i32, i32
  }
  func.func @transform_7(%arg0: i32) -> (i32, i32) {
    %c0_i32 = arith.constant 0 : i32
    %c0_i32_0 = arith.constant 0 : i32
    %c0_i32_1 = arith.constant 0 : i32
    return %c0_i32, %c0_i32_0 : i32, i32
  }
  func.func @transform_8(%arg0: i32) -> (i32, i32) {
    %c0_i32 = arith.constant 0 : i32
    %c0_i32_0 = arith.constant 0 : i32
    %c0_i32_1 = arith.constant 0 : i32
    return %c0_i32, %c0_i32_0 : i32, i32
  }
  func.func @transform_9(%arg0: i32) -> (i32, i32) {
    %c0_i32 = arith.constant 0 : i32
    %c0_i32_0 = arith.constant 0 : i32
    %c0_i32_1 = arith.constant 0 : i32
    return %c0_i32, %c0_i32_0 : i32, i32
  }
  func.func @transform_10(%arg0: i32) -> (i32, i32) {
    %c0_i32 = arith.constant 0 : i32
    %c0_i32_0 = arith.constant 0 : i32
    %c0_i32_1 = arith.constant 0 : i32
    return %c0_i32, %c0_i32_0 : i32, i32
  }
  func.func @transform_11(%arg0: i32) -> (i32, i32) {
    %c0_i32 = arith.constant 0 : i32
    %c0_i32_0 = arith.constant 0 : i32
    %c0_i32_1 = arith.constant 0 : i32
    return %c0_i32, %c0_i32_0 : i32, i32
  }
  func.func @transform_12(%arg0: i32) -> (i32, i32, i32) {
    %c0_i32 = arith.constant 0 : i32
    %c0_i32_0 = arith.constant 0 : i32
    %c0_i32_1 = arith.constant 0 : i32
    return %c0_i32, %arg0, %c0_i32_0 : i32, i32, i32
  }
}

</mosaic_0001>

<llo_original>
// kernel: tpu_custom_call.1
$region0: #{tpu_custom_call.1}
  #allocation0 [shape = 'u32[]', space=smem, size = 0x4, offset = 0x4, fixed_abs, tag = 'smem constant byte address 0x4 - core index']
  #allocation1 [shape = 'u32[144,128]{1,0:T(1,128)}', space=vmem, size = 0x12000, scoped, tag = 'internal scratch']
  #allocation2 [shape = 'f32[8,8,128]{2,1,0:T(8,128)}', space=vmem, size = 0x8000, scoped, tag = 'scratch operand']
  %s0 = inlined_call_operand.hbm [shape: f32[8,8,16], index: 0, kind: input, shape index: {}]
  %s1 = inlined_call_operand.hbm [shape: f32[16,128], index: 1, kind: input, shape index: {}]
  %s2 = inlined_call_operand.hbm [shape: bf16[128,128], index: 2, kind: input, shape index: {}]
  %s3 = inlined_call_operand.vmem [shape: f32[1,128], index: 3, kind: input, shape index: {}]
  %s4 = inlined_call_operand.vmem [shape: f32[1,128], index: 4, kind: input, shape index: {}]
  %s5 = inlined_call_operand.vmem [shape: f32[1,128], index: 5, kind: input, shape index: {}]
  %s6 = inlined_call_operand.hbm [shape: bf16[128,128], index: 6, kind: input, shape index: {}]
  %s7 = inlined_call_operand.vmem [shape: f32[1,128], index: 7, kind: input, shape index: {}]
  %s8 = inlined_call_operand.hbm [shape: bf16[128,128], index: 8, kind: input, shape index: {}]
  %s9 = inlined_call_operand.vmem [shape: f32[1,128], index: 9, kind: input, shape index: {}]
  %s10 = inlined_call_operand.hbm [shape: bf16[128,128], index: 10, kind: input, shape index: {}]
  %s11 = inlined_call_operand.vmem [shape: f32[1,128], index: 11, kind: input, shape index: {}]
  %s12 = inlined_call_operand.hbm [shape: f32[8,8,128], index: 12, kind: output, shape index: {}]
  %s13 = sld [smem:[#allocation0]]
  $region82: #{tpu_custom_call.1} parent=0
    _
  %s15 = ssub.s32 1, %s13
  %s16 = scalar_select 0, %s15, %s13
  $region1: #{tpu_custom_call.1} parent=0
    #allocation3 [shape = 'u8[32768]{0}', space=vmem, size = 0x8000, scoped, tag = 'input window, operand 0, single buffered']
    #allocation4 [shape = 's32[1]{0}', space=sflag, size = 0x4, scoped, tag = 'scoped memory for tpu_custom_call.1']
    #allocation5 [shape = 's32[1]{0}', space=sflag, size = 0x4, scoped, tag = 'scoped memory for tpu_custom_call.1']
    #allocation6 [shape = 'u8[8192]{0}', space=vmem, size = 0x2000, scoped, tag = 'input window, operand 1, single buffered']
    #allocation7 [shape = 's32[1]{0}', space=sflag, size = 0x4, scoped, tag = 'scoped memory for tpu_custom_call.1']
    #allocation8 [shape = 'u8[32768]{0}', space=vmem, size = 0x8000, scoped, tag = 'input window, operand 2, single buffered']
    #allocation9 [shape = 'u8[32768]{0}', space=vmem, size = 0x8000, scoped, tag = 'input window, operand 6, single buffered']
    #allocation10 [shape = 's32[1]{0}', space=sflag, size = 0x4, scoped, tag = 'scoped memory for tpu_custom_call.1']
    #allocation11 [shape = 'u8[32768]{0}', space=vmem, size = 0x8000, scoped, tag = 'input window, operand 8, single buffered']
    #allocation12 [shape = 'u8[32768]{0}', space=vmem, size = 0x8000, scoped, tag = 'input window, operand 10, single buffered']
    #allocation13 [shape = 's32[1]{0}', space=sflag, size = 0x4, scoped, tag = 'scoped memory for tpu_custom_call.1']
    #allocation14 [shape = 'u8[32768]{0}', space=vmem, size = 0x8000, scoped, tag = 'output window, operand 0, single buffered']
    %17 = vsyncpa [#allocation4], 0
    %18 = vsyncpa [#allocation7], 0
    %19 = vsyncpa [#allocation10], 0
    %20 = vsyncpa [#allocation13], 0
    %21 = vsyncpa [#allocation5], 0
    // Predicated region
    $region2: #{tpu_custom_call.1} parent=1 // pred_check
      _
    $region3: #{tpu_custom_call.1} parent=1 // pred_check_branch
      %23 = sbr.rel (0) target = $region5
    $region4: #{tpu_custom_call.1} parent=1 // pred_region
      %s25 = ssub.s32 1024, 1024
      %26 = vsyncadd [#allocation4], %s25
      %s27 = sshll.u32 [#allocation3], 4
      %s28 = int_to_ptr.vmem [resolvable:$true] %s27
      %33 = dma.hbm_to_vmem [thread:$0]  %s0, 1024, %s28, [#allocation4], 128, 128, 8
    $region5: #{tpu_custom_call.1} parent=1 // pred_fallthru
      _
    // Predicated region
    $region6: #{tpu_custom_call.1} parent=1 // pred_check
      _
    $region7: #{tpu_custom_call.1} parent=1 // pred_check_branch
      %35 = sbr.rel (0) target = $region9
    $region8: #{tpu_custom_call.1} parent=1 // pred_region
      %s37 = ssub.s32 256, 256
      %38 = vsyncadd [#allocation7], %s37
      %s39 = sshll.u32 [#allocation6], 4
      %s40 = int_to_ptr.vmem [resolvable:$true] %s39
      %45 = dma.hbm_to_vmem [thread:$0]  %s1, 256, %s40, [#allocation7], 128, 128, 8
    $region9: #{tpu_custom_call.1} parent=1 // pred_fallthru
      _
    // Predicated region
    $region10: #{tpu_custom_call.1} parent=1 // pred_check
      _
    $region11: #{tpu_custom_call.1} parent=1 // pred_check_branch
      %47 = sbr.rel (0) target = $region13
    $region12: #{tpu_custom_call.1} parent=1 // pred_region
      %s49 = ssub.s32 1024, 1024
      %50 = vsyncadd [#allocation7], %s49
      %s51 = sshll.u32 [#allocation8], 4
      %s52 = int_to_ptr.vmem [resolvable:$true] %s51
      %57 = dma.hbm_to_vmem [thread:$0]  %s2, 1024, %s52, [#allocation7], 64, 64, 4
    $region13: #{tpu_custom_call.1} parent=1 // pred_fallthru
      _
    // Predicated region
    $region14: #{tpu_custom_call.1} parent=1 // pred_check
      _
    $region15: #{tpu_custom_call.1} parent=1 // pred_check_branch
      %59 = sbr.rel (0) target = $region17
    $region16: #{tpu_custom_call.1} parent=1 // pred_region
      _
    $region17: #{tpu_custom_call.1} parent=1 // pred_fallthru
      _
    // Predicated region
    $region18: #{tpu_custom_call.1} parent=1 // pred_check
      _
    $region19: #{tpu_custom_call.1} parent=1 // pred_check_branch
      %61 = sbr.rel (0) target = $region21
    $region20: #{tpu_custom_call.1} parent=1 // pred_region
      _
    $region21: #{tpu_custom_call.1} parent=1 // pred_fallthru
      _
    // Predicated region
    $region22: #{tpu_custom_call.1} parent=1 // pred_check
      _
    $region23: #{tpu_custom_call.1} parent=1 // pred_check_branch
      %63 = sbr.rel (0) target = $region25
    $region24: #{tpu_custom_call.1} parent=1 // pred_region
      _
    $region25: #{tpu_custom_call.1} parent=1 // pred_fallthru
      _
    // Predicated region
    $region26: #{tpu_custom_call.1} parent=1 // pred_check
      _
    $region27: #{tpu_custom_call.1} parent=1 // pred_check_branch
      %65 = sbr.rel (0) target = $region29
    $region28: #{tpu_custom_call.1} parent=1 // pred_region
      %s67 = ssub.s32 1024, 1024
      %68 = vsyncadd [#allocation10], %s67
      %s69 = sshll.u32 [#allocation9], 4
      %s70 = int_to_ptr.vmem [resolvable:$true] %s69
      %75 = dma.hbm_to_vmem [thread:$0]  %s6, 1024, %s70, [#allocation10], 64, 64, 4
    $region29: #{tpu_custom_call.1} parent=1 // pred_fallthru
      _
    // Predicated region
    $region30: #{tpu_custom_call.1} parent=1 // pred_check
      _
    $region31: #{tpu_custom_call.1} parent=1 // pred_check_branch
      %77 = sbr.rel (0) target = $region33
    $region32: #{tpu_custom_call.1} parent=1 // pred_region
      _
    $region33: #{tpu_custom_call.1} parent=1 // pred_fallthru
      _
    // Predicated region
    $region34: #{tpu_custom_call.1} parent=1 // pred_check
      _
    $region35: #{tpu_custom_call.1} parent=1 // pred_check_branch
      %79 = sbr.rel (0) target = $region37
    $region36: #{tpu_custom_call.1} parent=1 // pred_region
      %s81 = ssub.s32 1024, 1024
      %82 = vsyncadd [#allocation10], %s81
      %s83 = sshll.u32 [#allocation11], 4
      %s84 = int_to_ptr.vmem [resolvable:$true] %s83
      %89 = dma.hbm_to_vmem [thread:$0]  %s8, 1024, %s84, [#allocation10], 64, 64, 4
    $region37: #{tpu_custom_call.1} parent=1 // pred_fallthru
      _
    // Predicated region
    $region38: #{tpu_custom_call.1} parent=1 // pred_check
      _
    $region39: #{tpu_custom_call.1} parent=1 // pred_check_branch
      %91 = sbr.rel (0) target = $region41
    $region40: #{tpu_custom_call.1} parent=1 // pred_region
      _
    $region41: #{tpu_custom_call.1} parent=1 // pred_fallthru
      _
    // Predicated region
    $region42: #{tpu_custom_call.1} parent=1 // pred_check
      _
    $region43: #{tpu_custom_call.1} parent=1 // pred_check_branch
      %93 = sbr.rel (0) target = $region45
    $region44: #{tpu_custom_call.1} parent=1 // pred_region
      %s95 = ssub.s32 1024, 1024
      %96 = vsyncadd [#allocation13], %s95
      %s97 = sshll.u32 [#allocation12], 4
      %s98 = int_to_ptr.vmem [resolvable:$true] %s97
      %103 = dma.hbm_to_vmem [thread:$0]  %s10, 1024, %s98, [#allocation13], 64, 64, 4
    $region45: #{tpu_custom_call.1} parent=1 // pred_fallthru
      _
    // Predicated region
    $region46: #{tpu_custom_call.1} parent=1 // pred_check
      _
    $region47: #{tpu_custom_call.1} parent=1 // pred_check_branch
      %105 = sbr.rel (0) target = $region49
    $region48: #{tpu_custom_call.1} parent=1 // pred_region
      _
    $region49: #{tpu_custom_call.1} parent=1 // pred_fallthru
      _
    // Predicated region
    $region50: #{tpu_custom_call.1} parent=1 // pred_check
      _
    $region51: #{tpu_custom_call.1} parent=1 // pred_check_branch
      %107 = sbr.rel (0) target = $region53
    $region52: #{tpu_custom_call.1} parent=1 // pred_region
      %108 = dma.done [#allocation4], 1024
    $region53: #{tpu_custom_call.1} parent=1 // pred_fallthru
      _
    // Predicated region
    $region54: #{tpu_custom_call.1} parent=1 // pred_check
      _
    $region55: #{tpu_custom_call.1} parent=1 // pred_check_branch
      %110 = sbr.rel (0) target = $region57
    $region56: #{tpu_custom_call.1} parent=1 // pred_region
      %111 = dma.done [#allocation7], 256
    $region57: #{tpu_custom_call.1} parent=1 // pred_fallthru
      _
    // Predicated region
    $region58: #{tpu_custom_call.1} parent=1 // pred_check
      _
    $region59: #{tpu_custom_call.1} parent=1 // pred_check_branch
      %113 = sbr.rel (0) target = $region61
    $region60: #{tpu_custom_call.1} parent=1 // pred_region
      %114 = dma.done [#allocation7], 1024
    $region61: #{tpu_custom_call.1} parent=1 // pred_fallthru
      _
    // Predicated region
    $region62: #{tpu_custom_call.1} parent=1 // pred_check
      _
    $region63: #{tpu_custom_call.1} parent=1 // pred_check_branch
      %116 = sbr.rel (0) target = $region65
    $region64: #{tpu_custom_call.1} parent=1 // pred_region
      %117 = dma.done [#allocation10], 1024
    $region65: #{tpu_custom_call.1} parent=1 // pred_fallthru
      _
    // Predicated region
    $region66: #{tpu_custom_call.1} parent=1 // pred_check
      _
    $region67: #{tpu_custom_call.1} parent=1 // pred_check_branch
      %119 = sbr.rel (0) target = $region69
    $region68: #{tpu_custom_call.1} parent=1 // pred_region
      %120 = dma.done [#allocation10], 1024
    $region69: #{tpu_custom_call.1} parent=1 // pred_fallthru
      _
    // Predicated region
    $region70: #{tpu_custom_call.1} parent=1 // pred_check
      _
    $region71: #{tpu_custom_call.1} parent=1 // pred_check_branch
      %122 = sbr.rel (0) target = $region73
    $region72: #{tpu_custom_call.1} parent=1 // pred_region
      %123 = dma.done [#allocation13], 1024
    $region73: #{tpu_custom_call.1} parent=1 // pred_fallthru
      _
    %v125 = vld [vmem:[#allocation3] sm:$0xff]
    %v126 = vld [vmem:[#allocation3 + $0x8] sm:$0xff]
    %v127 = vld [vmem:[#allocation3 + $0x10] sm:$0xff]
    %v128 = vld [vmem:[#allocation3 + $0x18] sm:$0xff]
    %v129 = vld [vmem:[#allocation3 + $0x20] sm:$0xff]
    %v130 = vld [vmem:[#allocation3 + $0x28] sm:$0xff]
    %v131 = vld [vmem:[#allocation3 + $0x30] sm:$0xff]
    %v132 = vld [vmem:[#allocation3 + $0x38] sm:$0xff]
    %v133 = vld [vmem:[#allocation6] sm:$0xff]
    %v134 = vld [vmem:[#allocation6 + $0x8] sm:$0xff]
    %v135 = vld [vmem:[%s3] sm:$0x1]
    %v137 = vlaneseq
    %v138 = vshrl.u32 %v137, 7
    %v139 = vsub.s32 0, %v138
    %v140 = vrot.slane %v135, %v139
    %vm142 = vcmask 130048
    %v144 = vsel %vm142, %v125, 0
    %v147 = vsel %vm142, %v126, 0
    %v150 = vsel %vm142, %v127, 0
    %v153 = vsel %vm142, %v128, 0
    %v156 = vsel %vm142, %v129, 0
    %v159 = vsel %vm142, %v130, 0
    %v162 = vsel %vm142, %v131, 0
    %v165 = vsel %vm142, %v132, 0
    %167 = vmatprep.subr.mxu0 0.0
    %168 = vmatpush1.msra.mxu0 %v133
    %169 = vmatprep.subr.mxu0 0.0
    %170 = vmatpush1.msra.mxu0 %v134
    %171 = vmatprep.subr.mxu0 0.0
    %172 = vmatpush1.msra.mxu0 0.0
    %173 = vmatprep.subr.mxu0 0.0
    %174 = vmatpush1.msra.mxu0 0.0
    %175 = vmatprep.subr.mxu0 0.0
    %176 = vmatpush1.msra.mxu0 0.0
    %177 = vmatprep.subr.mxu0 0.0
    %178 = vmatpush1.msra.mxu0 0.0
    %179 = vmatprep.subr.mxu0 0.0
    %180 = vmatpush1.msra.mxu0 0.0
    %181 = vmatprep.subr.mxu0 0.0
    %182 = vmatpush1.msra.mxu0 0.0
    %183 = vmatprep.subr.mxu0 0.0
    %184 = vmatpush1.msra.mxu0 0.0
    %185 = vmatprep.subr.mxu0 0.0
    %186 = vmatpush1.msra.mxu0 0.0
    %187 = vmatprep.subr.mxu0 0.0
    %188 = vmatpush1.msra.mxu0 0.0
    %189 = vmatprep.subr.mxu0 0.0
    %190 = vmatpush1.msra.mxu0 0.0
    %191 = vmatprep.subr.mxu0 0.0
    %192 = vmatpush1.msra.mxu0 0.0
    %193 = vmatprep.subr.mxu0 0.0
    %194 = vmatpush1.msra.mxu0 0.0
    %195 = vmatprep.subr.mxu0 0.0
    %196 = vmatpush1.msra.mxu0 0.0
    %197 = vmatprep.subr.mxu0 0.0
    %198 = vmatpush1.msra.mxu0 0.0
    %199 = vmatprep.subr.mxu0 0.0
    %200 = vmatpush1.msra.mxu0 0.0
    %201 = vmatprep.subr.mxu0 0.0
    %202 = vmatpush1.msra.mxu0 0.0
    %203 = vmatprep.subr.mxu0 0.0
    %204 = vmatpush1.msra.mxu0 0.0
    %205 = vmatprep.subr.mxu0 0.0
    %206 = vmatpush1.msra.mxu0 0.0
    %207 = vmatprep.subr.mxu0 0.0
    %208 = vmatpush1.msra.mxu0 0.0
    %209 = vmatprep.subr.mxu0 0.0
    %210 = vmatpush1.msra.mxu0 0.0
    %211 = vmatprep.subr.mxu0 0.0
    %212 = vmatpush1.msra.mxu0 0.0
    %213 = vmatprep.subr.mxu0 0.0
    %214 = vmatpush1.msra.mxu0 0.0
    %215 = vmatprep.subr.mxu0 0.0
    %216 = vmatpush1.msra.mxu0 0.0
    %217 = vmatprep.subr.mxu0 0.0
    %218 = vmatpush1.msra.mxu0 0.0
    %219 = vmatprep.subr.mxu0 0.0
    %220 = vmatpush1.msra.mxu0 0.0
    %221 = vmatprep.subr.mxu0 0.0
    %222 = vmatpush1.msra.mxu0 0.0
    %223 = vmatprep.subr.mxu0 0.0
    %224 = vmatpush1.msra.mxu0 0.0
    %225 = vmatprep.subr.mxu0 0.0
    %226 = vmatpush1.msra.mxu0 0.0
    %227 = vmatprep.subr.mxu0 0.0
    %228 = vmatpush1.msra.mxu0 0.0
    %229 = vmatprep.subr.mxu0 0.0
    %230 = vmatpush1.msra.mxu0 0.0
    %231 = vmatprep.mubr.f32.mxu0 0.0
    %232 = vmatmul.mubr.f32.gmra.mrb[0].mxu0 %v144
    %v233 = vpop.f32.mrb[0].mxu0
    %v234 = vadd.f32 %v140, %v233
    %v235 = vpop.f32.mrb[0].mxu0
    %236 = vmatprep.mubr.f32.mxu0 0.0
    %237 = vmatmul.mubr.f32.gmra.mrb[0].mxu0 %v147
    %v238 = vpop.f32.mrb[0].mxu0
    %v239 = vadd.f32 %v140, %v238
    %v240 = vpop.f32.mrb[0].mxu0
    %241 = vmatprep.mubr.f32.mxu0 0.0
    %242 = vmatmul.mubr.f32.gmra.mrb[0].mxu0 %v150
    %v243 = vpop.f32.mrb[0].mxu0
    %v244 = vadd.f32 %v140, %v243
    %v245 = vpop.f32.mrb[0].mxu0
    %246 = vmatprep.mubr.f32.mxu0 0.0
    %247 = vmatmul.mubr.f32.gmra.mrb[0].mxu0 %v153
    %v248 = vpop.f32.mrb[0].mxu0
    %v249 = vadd.f32 %v140, %v248
    %v250 = vpop.f32.mrb[0].mxu0
    %251 = vmatprep.mubr.f32.mxu0 0.0
    %252 = vmatmul.mubr.f32.gmra.mrb[0].mxu0 %v156
    %v253 = vpop.f32.mrb[0].mxu0
    %v254 = vadd.f32 %v140, %v253
    %v255 = vpop.f32.mrb[0].mxu0
    %256 = vmatprep.mubr.f32.mxu0 0.0
    %257 = vmatmul.mubr.f32.gmra.mrb[0].mxu0 %v159
    %v258 = vpop.f32.mrb[0].mxu0
    %v259 = vadd.f32 %v140, %v258
    %v260 = vpop.f32.mrb[0].mxu0
    %261 = vmatprep.mubr.f32.mxu0 0.0
    %262 = vmatmul.mubr.f32.gmra.mrb[0].mxu0 %v162
    %v263 = vpop.f32.mrb[0].mxu0
    %v264 = vadd.f32 %v140, %v263
    %v265 = vpop.f32.mrb[0].mxu0
    %266 = vmatprep.mubr.f32.mxu0 0.0
    %267 = vmatmul.mubr.f32.gmra.mrb[0].mxu0 %v165
    %v268 = vpop.f32.mrb[0].mxu0
    %v269 = vadd.f32 %v140, %v268
    %v270 = vpop.f32.mrb[0].mxu0
    %271 = vdwg.mxu0
    %272 = vst [vmem:[#allocation2] sm:$0xff] %v234
    %273 = vst [vmem:[#allocation2 + $0x8] sm:$0xff] %v239
    %274 = vst [vmem:[#allocation2 + $0x10] sm:$0xff] %v244
    %275 = vst [vmem:[#allocation2 + $0x18] sm:$0xff] %v249
    %276 = vst [vmem:[#allocation2 + $0x20] sm:$0xff] %v254
    %277 = vst [vmem:[#allocation2 + $0x28] sm:$0xff] %v259
    %278 = vst [vmem:[#allocation2 + $0x30] sm:$0xff] %v264
    %279 = vst [vmem:[#allocation2 + $0x38] sm:$0xff] %v269
    %v280 = vld [vmem:[#allocation8] sm:$0xf]
    %v281 = vld [vmem:[#allocation8 + $0x4] sm:$0xf]
    %v282 = vld [vmem:[#allocation8 + $0x8] sm:$0xf]
    %v283 = vld [vmem:[#allocation8 + $0xc] sm:$0xf]
    %v284 = vld [vmem:[#allocation8 + $0x10] sm:$0xf]
    %v285 = vld [vmem:[#allocation8 + $0x14] sm:$0xf]
    %v286 = vld [vmem:[#allocation8 + $0x18] sm:$0xf]
    %v287 = vld [vmem:[#allocation8 + $0x1c] sm:$0xf]
    %v288 = vld [vmem:[#allocation8 + $0x20] sm:$0xf]
    %v289 = vld [vmem:[#allocation8 + $0x24] sm:$0xf]
    %v290 = vld [vmem:[#allocation8 + $0x28] sm:$0xf]
    %v291 = vld [vmem:[#allocation8 + $0x2c] sm:$0xf]
    %v292 = vld [vmem:[#allocation8 + $0x30] sm:$0xf]
    %v293 = vld [vmem:[#allocation8 + $0x34] sm:$0xf]
    %v294 = vld [vmem:[#allocation8 + $0x38] sm:$0xf]
    %v295 = vld [vmem:[#allocation8 + $0x3c] sm:$0xf]
    %v296 = vld [vmem:[%s4] sm:$0x1]
    %v298 = vlaneseq
    %v299 = vshrl.u32 %v298, 7
    %v300 = vsub.s32 0, %v299
    %v301 = vrot.slane %v296, %v300
    %s303 = scalar_lea.vmem [#allocation2], 56
    %v304 = vld [vmem:[%s303] sm:$0xff]
    %v305 = vpack.c.bf16 %v301, %v301
    %v322 = vunpack.c.l.b16 %v280
    %v323 = vunpack.c.l.b16 %v281
    %v324 = vunpack.c.l.b16 %v282
    %v325 = vunpack.c.l.b16 %v283
    %v326 = vunpack.c.l.b16 %v284
    %v327 = vunpack.c.l.b16 %v285
    %v328 = vunpack.c.l.b16 %v286
    %v329 = vunpack.c.l.b16 %v287
    %v330 = vunpack.c.l.b16 %v288
    %v331 = vunpack.c.l.b16 %v289
    %v332 = vunpack.c.l.b16 %v290
    %v333 = vunpack.c.l.b16 %v291
    %v334 = vunpack.c.l.b16 %v292
    %v335 = vunpack.c.l.b16 %v293
    %v336 = vunpack.c.l.b16 %v294
    %v337 = vunpack.c.l.b16 %v295
    %v338 = vpack.c.b16 %v323, %v322
    %v339 = vpack.c.b16 %v325, %v324
    %v340 = vpack.c.b16 %v327, %v326
    %v341 = vpack.c.b16 %v329, %v328
    %v342 = vpack.c.b16 %v331, %v330
    %v343 = vpack.c.b16 %v333, %v332
    %v344 = vpack.c.b16 %v335, %v334
    %v345 = vpack.c.b16 %v337, %v336
    %354 = vmatprep.subr.bf16.mxu0 0
    %355 = vmatpush1.bf16.msra.mxu0 %v338
    %356 = vmatprep.subr.bf16.mxu0 0
    %357 = vmatpush1.bf16.msra.mxu0 %v339
    %358 = vmatprep.subr.bf16.mxu0 0
    %359 = vmatpush1.bf16.msra.mxu0 %v340
    %360 = vmatprep.subr.bf16.mxu0 0
    %361 = vmatpush1.bf16.msra.mxu0 %v341
    %362 = vmatprep.subr.bf16.mxu0 0
    %363 = vmatpush1.bf16.msra.mxu0 %v342
    %364 = vmatprep.subr.bf16.mxu0 0
    %365 = vmatpush1.bf16.msra.mxu0 %v343
    %366 = vmatprep.subr.bf16.mxu0 0
    %367 = vmatpush1.bf16.msra.mxu0 %v344
    %368 = vmatprep.subr.bf16.mxu0 0
    %369 = vmatpush1.bf16.msra.mxu0 %v345
    %370 = vmatprep.subr.bf16.mxu0 0
    %371 = vmatpush1.bf16.msra.mxu0 0
    %372 = vmatprep.subr.bf16.mxu0 0
    %373 = vmatpush1.bf16.msra.mxu0 0
    %374 = vmatprep.subr.bf16.mxu0 0
    %375 = vmatpush1.bf16.msra.mxu0 0
    %376 = vmatprep.subr.bf16.mxu0 0
    %377 = vmatpush1.bf16.msra.mxu0 0
    %378 = vmatprep.subr.bf16.mxu0 0
    %379 = vmatpush1.bf16.msra.mxu0 0
    %380 = vmatprep.subr.bf16.mxu0 0
    %381 = vmatpush1.bf16.msra.mxu0 0
    %382 = vmatprep.subr.bf16.mxu0 0
    %383 = vmatpush1.bf16.msra.mxu0 0
    %384 = vmatprep.subr.bf16.mxu0 0
    %385 = vmatpush1.bf16.msra.mxu0 0
    %386 = vmatprep.mubr.bf16.mxu0 0
    %387 = vmatmul.mubr.bf16.gmra.mrb[0].mxu0 %v305
    %v388 = vpop.f32.mrb[0].mxu0
    %v389 = vadd.f32 0.0, %v388
    %v390 = vpop.f32.mrb[0].mxu0
    %v391 = vpop.f32.mrb[0].mxu0
    %v392 = vpop.f32.mrb[0].mxu0
    %393 = vdwg.mxu0
    %v394 = vadd.f32 %v304, %v389
    %v395 = vmax.f32 %v394, 0.0
    %396 = vst [vmem:[%s303] sm:$0xff] %v395
    %s397 = scalar_lea.vmem [#allocation2], 48
    %v398 = vld [vmem:[%s397] sm:$0xff]
    %v399 = vpack.c.bf16 %v395, %v395
    %400 = vmatprep.subr.bf16.mxu0 0
    %401 = vmatpush1.bf16.msra.mxu0 %v338
    %402 = vmatprep.subr.bf16.mxu0 0
    %403 = vmatpush1.bf16.msra.mxu0 %v339
    %404 = vmatprep.subr.bf16.mxu0 0
    %405 = vmatpush1.bf16.msra.mxu0 %v340
    %406 = vmatprep.subr.bf16.mxu0 0
    %407 = vmatpush1.bf16.msra.mxu0 %v341
    %408 = vmatprep.subr.bf16.mxu0 0
    %409 = vmatpush1.bf16.msra.mxu0 %v342
    %410 = vmatprep.subr.bf16.mxu0 0
    %411 = vmatpush1.bf16.msra.mxu0 %v343
    %412 = vmatprep.subr.bf16.mxu0 0
    %413 = vmatpush1.bf16.msra.mxu0 %v344
    %414 = vmatprep.subr.bf16.mxu0 0
    %415 = vmatpush1.bf16.msra.mxu0 %v345
    %416 = vmatprep.subr.bf16.mxu0 0
    %417 = vmatpush1.bf16.msra.mxu0 0
    %418 = vmatprep.subr.bf16.mxu0 0
    %419 = vmatpush1.bf16.msra.mxu0 0
    %420 = vmatprep.subr.bf16.mxu0 0
    %421 = vmatpush1.bf16.msra.mxu0 0
    %422 = vmatprep.subr.bf16.mxu0 0
    %423 = vmatpush1.bf16.msra.mxu0 0
    %424 = vmatprep.subr.bf16.mxu0 0
    %425 = vmatpush1.bf16.msra.mxu0 0
    %426 = vmatprep.subr.bf16.mxu0 0
    %427 = vmatpush1.bf16.msra.mxu0 0
    %428 = vmatprep.subr.bf16.mxu0 0
    %429 = vmatpush1.bf16.msra.mxu0 0
    %430 = vmatprep.subr.bf16.mxu0 0
    %431 = vmatpush1.bf16.msra.mxu0 0
    %432 = vmatprep.mubr.bf16.mxu0 0
    %433 = vmatmul.mubr.bf16.gmra.mrb[0].mxu0 %v399
    %v434 = vpop.f32.mrb[0].mxu0
    %v435 = vadd.f32 0.0, %v434
    %v436 = vpop.f32.mrb[0].mxu0
    %v437 = vpop.f32.mrb[0].mxu0
    %v438 = vpop.f32.mrb[0].mxu0
    %439 = vdwg.mxu0
    %v440 = vadd.f32 %v398, %v435
    %v441 = vmax.f32 %v440, 0.0
    %442 = vst [vmem:[%s397] sm:$0xff] %v441
    %s443 = scalar_lea.vmem [#allocation2], 40
    %v444 = vld [vmem:[%s443] sm:$0xff]
    %v445 = vpack.c.bf16 %v441, %v441
    %446 = vmatprep.subr.bf16.mxu0 0
    %447 = vmatpush1.bf16.msra.mxu0 %v338
    %448 = vmatprep.subr.bf16.mxu0 0
    %449 = vmatpush1.bf16.msra.mxu0 %v339
    %450 = vmatprep.subr.bf16.mxu0 0
    %451 = vmatpush1.bf16.msra.mxu0 %v340
    %452 = vmatprep.subr.bf16.mxu0 0
    %453 = vmatpush1.bf16.msra.mxu0 %v341
    %454 = vmatprep.subr.bf16.mxu0 0
    %455 = vmatpush1.bf16.msra.mxu0 %v342
    %456 = vmatprep.subr.bf16.mxu0 0
    %457 = vmatpush1.bf16.msra.mxu0 %v343
    %458 = vmatprep.subr.bf16.mxu0 0
    %459 = vmatpush1.bf16.msra.mxu0 %v344
    %460 = vmatprep.subr.bf16.mxu0 0
    %461 = vmatpush1.bf16.msra.mxu0 %v345
    %462 = vmatprep.subr.bf16.mxu0 0
    %463 = vmatpush1.bf16.msra.mxu0 0
    %464 = vmatprep.subr.bf16.mxu0 0
    %465 = vmatpush1.bf16.msra.mxu0 0
    %466 = vmatprep.subr.bf16.mxu0 0
    %467 = vmatpush1.bf16.msra.mxu0 0
    %468 = vmatprep.subr.bf16.mxu0 0
    %469 = vmatpush1.bf16.msra.mxu0 0
    %470 = vmatprep.subr.bf16.mxu0 0
    %471 = vmatpush1.bf16.msra.mxu0 0
    %472 = vmatprep.subr.bf16.mxu0 0
    %473 = vmatpush1.bf16.msra.mxu0 0
    %474 = vmatprep.subr.bf16.mxu0 0
    %475 = vmatpush1.bf16.msra.mxu0 0
    %476 = vmatprep.subr.bf16.mxu0 0
    %477 = vmatpush1.bf16.msra.mxu0 0
    %478 = vmatprep.mubr.bf16.mxu0 0
    %479 = vmatmul.mubr.bf16.gmra.mrb[0].mxu0 %v445
    %v480 = vpop.f32.mrb[0].mxu0
    %v481 = vadd.f32 0.0, %v480
    %v482 = vpop.f32.mrb[0].mxu0
    %v483 = vpop.f32.mrb[0].mxu0
    %v484 = vpop.f32.mrb[0].mxu0
    %485 = vdwg.mxu0
    %v486 = vadd.f32 %v444, %v481
    %v487 = vmax.f32 %v486, 0.0
    %488 = vst [vmem:[%s443] sm:$0xff] %v487
    %s489 = scalar_lea.vmem [#allocation2], 32
    %v490 = vld [vmem:[%s489] sm:$0xff]
    %v491 = vpack.c.bf16 %v487, %v487
    %492 = vmatprep.subr.bf16.mxu0 0
    %493 = vmatpush1.bf16.msra.mxu0 %v338
    %494 = vmatprep.subr.bf16.mxu0 0
    %495 = vmatpush1.bf16.msra.mxu0 %v339
    %496 = vmatprep.subr.bf16.mxu0 0
    %497 = vmatpush1.bf16.msra.mxu0 %v340
    %498 = vmatprep.subr.bf16.mxu0 0
    %499 = vmatpush1.bf16.msra.mxu0 %v341
    %500 = vmatprep.subr.bf16.mxu0 0
    %501 = vmatpush1.bf16.msra.mxu0 %v342
    %502 = vmatprep.subr.bf16.mxu0 0
    %503 = vmatpush1.bf16.msra.mxu0 %v343
    %504 = vmatprep.subr.bf16.mxu0 0
    %505 = vmatpush1.bf16.msra.mxu0 %v344
    %506 = vmatprep.subr.bf16.mxu0 0
    %507 = vmatpush1.bf16.msra.mxu0 %v345
    %508 = vmatprep.subr.bf16.mxu0 0
    %509 = vmatpush1.bf16.msra.mxu0 0
    %510 = vmatprep.subr.bf16.mxu0 0
    %511 = vmatpush1.bf16.msra.mxu0 0
    %512 = vmatprep.subr.bf16.mxu0 0
    %513 = vmatpush1.bf16.msra.mxu0 0
    %514 = vmatprep.subr.bf16.mxu0 0
    %515 = vmatpush1.bf16.msra.mxu0 0
    %516 = vmatprep.subr.bf16.mxu0 0
    %517 = vmatpush1.bf16.msra.mxu0 0
    %518 = vmatprep.subr.bf16.mxu0 0
    %519 = vmatpush1.bf16.msra.mxu0 0
    %520 = vmatprep.subr.bf16.mxu0 0
    %521 = vmatpush1.bf16.msra.mxu0 0
    %522 = vmatprep.subr.bf16.mxu0 0
    %523 = vmatpush1.bf16.msra.mxu0 0
    %524 = vmatprep.mubr.bf16.mxu0 0
    %525 = vmatmul.mubr.bf16.gmra.mrb[0].mxu0 %v491
    %v526 = vpop.f32.mrb[0].mxu0
    %v527 = vadd.f32 0.0, %v526
    %v528 = vpop.f32.mrb[0].mxu0
    %v529 = vpop.f32.mrb[0].mxu0
    %v530 = vpop.f32.mrb[0].mxu0
    %531 = vdwg.mxu0
    %v532 = vadd.f32 %v490, %v527
    %v533 = vmax.f32 %v532, 0.0
    %534 = vst [vmem:[%s489] sm:$0xff] %v533
    %s535 = scalar_lea.vmem [#allocation2], 24
    %v536 = vld [vmem:[%s535] sm:$0xff]
    %v537 = vpack.c.bf16 %v533, %v533
    %538 = vmatprep.subr.bf16.mxu0 0
    %539 = vmatpush1.bf16.msra.mxu0 %v338
    %540 = vmatprep.subr.bf16.mxu0 0
    %541 = vmatpush1.bf16.msra.mxu0 %v339
    %542 = vmatprep.subr.bf16.mxu0 0
    %543 = vmatpush1.bf16.msra.mxu0 %v340
    %544 = vmatprep.subr.bf16.mxu0 0
    %545 = vmatpush1.bf16.msra.mxu0 %v341
    %546 = vmatprep.subr.bf16.mxu0 0
    %547 = vmatpush1.bf16.msra.mxu0 %v342
    %548 = vmatprep.subr.bf16.mxu0 0
    %549 = vmatpush1.bf16.msra.mxu0 %v343
    %550 = vmatprep.subr.bf16.mxu0 0
    %551 = vmatpush1.bf16.msra.mxu0 %v344
    %552 = vmatprep.subr.bf16.mxu0 0
    %553 = vmatpush1.bf16.msra.mxu0 %v345
    %554 = vmatprep.subr.bf16.mxu0 0
    %555 = vmatpush1.bf16.msra.mxu0 0
    %556 = vmatprep.subr.bf16.mxu0 0
    %557 = vmatpush1.bf16.msra.mxu0 0
    %558 = vmatprep.subr.bf16.mxu0 0
    %559 = vmatpush1.bf16.msra.mxu0 0
    %560 = vmatprep.subr.bf16.mxu0 0
    %561 = vmatpush1.bf16.msra.mxu0 0
    %562 = vmatprep.subr.bf16.mxu0 0
    %563 = vmatpush1.bf16.msra.mxu0 0
    %564 = vmatprep.subr.bf16.mxu0 0
    %565 = vmatpush1.bf16.msra.mxu0 0
    %566 = vmatprep.subr.bf16.mxu0 0
    %567 = vmatpush1.bf16.msra.mxu0 0
    %568 = vmatprep.subr.bf16.mxu0 0
    %569 = vmatpush1.bf16.msra.mxu0 0
    %570 = vmatprep.mubr.bf16.mxu0 0
    %571 = vmatmul.mubr.bf16.gmra.mrb[0].mxu0 %v537
    %v572 = vpop.f32.mrb[0].mxu0
    %v573 = vadd.f32 0.0, %v572
    %v574 = vpop.f32.mrb[0].mxu0
    %v575 = vpop.f32.mrb[0].mxu0
    %v576 = vpop.f32.mrb[0].mxu0
    %577 = vdwg.mxu0
    %v578 = vadd.f32 %v536, %v573
    %v579 = vmax.f32 %v578, 0.0
    %580 = vst [vmem:[%s535] sm:$0xff] %v579
    %s581 = scalar_lea.vmem [#allocation2], 16
    %v582 = vld [vmem:[%s581] sm:$0xff]
    %v583 = vpack.c.bf16 %v579, %v579
    %584 = vmatprep.subr.bf16.mxu0 0
    %585 = vmatpush1.bf16.msra.mxu0 %v338
    %586 = vmatprep.subr.bf16.mxu0 0
    %587 = vmatpush1.bf16.msra.mxu0 %v339
    %588 = vmatprep.subr.bf16.mxu0 0
    %589 = vmatpush1.bf16.msra.mxu0 %v340
    %590 = vmatprep.subr.bf16.mxu0 0
    %591 = vmatpush1.bf16.msra.mxu0 %v341
    %592 = vmatprep.subr.bf16.mxu0 0
    %593 = vmatpush1.bf16.msra.mxu0 %v342
    %594 = vmatprep.subr.bf16.mxu0 0
    %595 = vmatpush1.bf16.msra.mxu0 %v343
    %596 = vmatprep.subr.bf16.mxu0 0
    %597 = vmatpush1.bf16.msra.mxu0 %v344
    %598 = vmatprep.subr.bf16.mxu0 0
    %599 = vmatpush1.bf16.msra.mxu0 %v345
    %600 = vmatprep.subr.bf16.mxu0 0
    %601 = vmatpush1.bf16.msra.mxu0 0
    %602 = vmatprep.subr.bf16.mxu0 0
    %603 = vmatpush1.bf16.msra.mxu0 0
    %604 = vmatprep.subr.bf16.mxu0 0
    %605 = vmatpush1.bf16.msra.mxu0 0
    %606 = vmatprep.subr.bf16.mxu0 0
    %607 = vmatpush1.bf16.msra.mxu0 0
    %608 = vmatprep.subr.bf16.mxu0 0
    %609 = vmatpush1.bf16.msra.mxu0 0
    %610 = vmatprep.subr.bf16.mxu0 0
    %611 = vmatpush1.bf16.msra.mxu0 0
    %612 = vmatprep.subr.bf16.mxu0 0
    %613 = vmatpush1.bf16.msra.mxu0 0
    %614 = vmatprep.subr.bf16.mxu0 0
    %615 = vmatpush1.bf16.msra.mxu0 0
    %616 = vmatprep.mubr.bf16.mxu0 0
    %617 = vmatmul.mubr.bf16.gmra.mrb[0].mxu0 %v583
    %v618 = vpop.f32.mrb[0].mxu0
    %v619 = vadd.f32 0.0, %v618
    %v620 = vpop.f32.mrb[0].mxu0
    %v621 = vpop.f32.mrb[0].mxu0
    %v622 = vpop.f32.mrb[0].mxu0
    %623 = vdwg.mxu0
    %v624 = vadd.f32 %v582, %v619
    %v625 = vmax.f32 %v624, 0.0
    %626 = vst [vmem:[%s581] sm:$0xff] %v625
    %s627 = scalar_lea.vmem [#allocation2], 8
    %v628 = vld [vmem:[%s627] sm:$0xff]
    %v629 = vpack.c.bf16 %v625, %v625
    %630 = vmatprep.subr.bf16.mxu0 0
    %631 = vmatpush1.bf16.msra.mxu0 %v338
    %632 = vmatprep.subr.bf16.mxu0 0
    %633 = vmatpush1.bf16.msra.mxu0 %v339
    %634 = vmatprep.subr.bf16.mxu0 0
    %635 = vmatpush1.bf16.msra.mxu0 %v340
    %636 = vmatprep.subr.bf16.mxu0 0
    %637 = vmatpush1.bf16.msra.mxu0 %v341
    %638 = vmatprep.subr.bf16.mxu0 0
    %639 = vmatpush1.bf16.msra.mxu0 %v342
    %640 = vmatprep.subr.bf16.mxu0 0
    %641 = vmatpush1.bf16.msra.mxu0 %v343
    %642 = vmatprep.subr.bf16.mxu0 0
    %643 = vmatpush1.bf16.msra.mxu0 %v344
    %644 = vmatprep.subr.bf16.mxu0 0
    %645 = vmatpush1.bf16.msra.mxu0 %v345
    %646 = vmatprep.subr.bf16.mxu0 0
    %647 = vmatpush1.bf16.msra.mxu0 0
    %648 = vmatprep.subr.bf16.mxu0 0
    %649 = vmatpush1.bf16.msra.mxu0 0
    %650 = vmatprep.subr.bf16.mxu0 0
    %651 = vmatpush1.bf16.msra.mxu0 0
    %652 = vmatprep.subr.bf16.mxu0 0
    %653 = vmatpush1.bf16.msra.mxu0 0
    %654 = vmatprep.subr.bf16.mxu0 0
    %655 = vmatpush1.bf16.msra.mxu0 0
    %656 = vmatprep.subr.bf16.mxu0 0
    %657 = vmatpush1.bf16.msra.mxu0 0
    %658 = vmatprep.subr.bf16.mxu0 0
    %659 = vmatpush1.bf16.msra.mxu0 0
    %660 = vmatprep.subr.bf16.mxu0 0
    %661 = vmatpush1.bf16.msra.mxu0 0
    %662 = vmatprep.mubr.bf16.mxu0 0
    %663 = vmatmul.mubr.bf16.gmra.mrb[0].mxu0 %v629
    %v664 = vpop.f32.mrb[0].mxu0
    %v665 = vadd.f32 0.0, %v664
    %v666 = vpop.f32.mrb[0].mxu0
    %v667 = vpop.f32.mrb[0].mxu0
    %v668 = vpop.f32.mrb[0].mxu0
    %669 = vdwg.mxu0
    %v670 = vadd.f32 %v628, %v665
    %v671 = vmax.f32 %v670, 0.0
    %672 = vst [vmem:[%s627] sm:$0xff] %v671
    %v673 = vld [vmem:[#allocation2] sm:$0xff]
    %v674 = vpack.c.bf16 %v671, %v671
    %675 = vmatprep.subr.bf16.mxu0 0
    %676 = vmatpush1.bf16.msra.mxu0 %v338
    %677 = vmatprep.subr.bf16.mxu0 0
    %678 = vmatpush1.bf16.msra.mxu0 %v339
    %679 = vmatprep.subr.bf16.mxu0 0
    %680 = vmatpush1.bf16.msra.mxu0 %v340
    %681 = vmatprep.subr.bf16.mxu0 0
    %682 = vmatpush1.bf16.msra.mxu0 %v341
    %683 = vmatprep.subr.bf16.mxu0 0
    %684 = vmatpush1.bf16.msra.mxu0 %v342
    %685 = vmatprep.subr.bf16.mxu0 0
    %686 = vmatpush1.bf16.msra.mxu0 %v343
    %687 = vmatprep.subr.bf16.mxu0 0
    %688 = vmatpush1.bf16.msra.mxu0 %v344
    %689 = vmatprep.subr.bf16.mxu0 0
    %690 = vmatpush1.bf16.msra.mxu0 %v345
    %691 = vmatprep.subr.bf16.mxu0 0
    %692 = vmatpush1.bf16.msra.mxu0 0
    %693 = vmatprep.subr.bf16.mxu0 0
    %694 = vmatpush1.bf16.msra.mxu0 0
    %695 = vmatprep.subr.bf16.mxu0 0
    %696 = vmatpush1.bf16.msra.mxu0 0
    %697 = vmatprep.subr.bf16.mxu0 0
    %698 = vmatpush1.bf16.msra.mxu0 0
    %699 = vmatprep.subr.bf16.mxu0 0
    %700 = vmatpush1.bf16.msra.mxu0 0
    %701 = vmatprep.subr.bf16.mxu0 0
    %702 = vmatpush1.bf16.msra.mxu0 0
    %703 = vmatprep.subr.bf16.mxu0 0
    %704 = vmatpush1.bf16.msra.mxu0 0
    %705 = vmatprep.subr.bf16.mxu0 0
    %706 = vmatpush1.bf16.msra.mxu0 0
    %707 = vmatprep.mubr.bf16.mxu0 0
    %708 = vmatmul.mubr.bf16.gmra.mrb[0].mxu0 %v674
    %v709 = vpop.f32.mrb[0].mxu0
    %v710 = vadd.f32 0.0, %v709
    %v711 = vpop.f32.mrb[0].mxu0
    %v712 = vpop.f32.mrb[0].mxu0
    %v713 = vpop.f32.mrb[0].mxu0
    %714 = vdwg.mxu0
    %v715 = vadd.f32 %v673, %v710
    %v716 = vmax.f32 %v715, 0.0
    %717 = vst [vmem:[#allocation2] sm:$0xff] %v716
    %v718 = vld [vmem:[#allocation9] sm:$0xf]
    %v719 = vld [vmem:[#allocation9 + $0x4] sm:$0xf]
    %v720 = vld [vmem:[#allocation9 + $0x8] sm:$0xf]
    %v721 = vld [vmem:[#allocation9 + $0xc] sm:$0xf]
    %v722 = vld [vmem:[#allocation9 + $0x10] sm:$0xf]
    %v723 = vld [vmem:[#allocation9 + $0x14] sm:$0xf]
    %v724 = vld [vmem:[#allocation9 + $0x18] sm:$0xf]
    %v725 = vld [vmem:[#allocation9 + $0x1c] sm:$0xf]
    %v726 = vld [vmem:[#allocation9 + $0x20] sm:$0xf]
    %v727 = vld [vmem:[#allocation9 + $0x24] sm:$0xf]
    %v728 = vld [vmem:[#allocation9 + $0x28] sm:$0xf]
    %v729 = vld [vmem:[#allocation9 + $0x2c] sm:$0xf]
    %v730 = vld [vmem:[#allocation9 + $0x30] sm:$0xf]
    %v731 = vld [vmem:[#allocation9 + $0x34] sm:$0xf]
    %v732 = vld [vmem:[#allocation9 + $0x38] sm:$0xf]
    %v733 = vld [vmem:[#allocation9 + $0x3c] sm:$0xf]
    %v734 = vld [vmem:[#allocation11] sm:$0xf]
    %v735 = vld [vmem:[#allocation11 + $0x4] sm:$0xf]
    %v736 = vld [vmem:[#allocation11 + $0x8] sm:$0xf]
    %v737 = vld [vmem:[#allocation11 + $0xc] sm:$0xf]
    %v738 = vld [vmem:[#allocation11 + $0x10] sm:$0xf]
    %v739 = vld [vmem:[#allocation11 + $0x14] sm:$0xf]
    %v740 = vld [vmem:[#allocation11 + $0x18] sm:$0xf]
    %v741 = vld [vmem:[#allocation11 + $0x1c] sm:$0xf]
    %v742 = vld [vmem:[#allocation11 + $0x20] sm:$0xf]
    %v743 = vld [vmem:[#allocation11 + $0x24] sm:$0xf]
    %v744 = vld [vmem:[#allocation11 + $0x28] sm:$0xf]
    %v745 = vld [vmem:[#allocation11 + $0x2c] sm:$0xf]
    %v746 = vld [vmem:[#allocation11 + $0x30] sm:$0xf]
    %v747 = vld [vmem:[#allocation11 + $0x34] sm:$0xf]
    %v748 = vld [vmem:[#allocation11 + $0x38] sm:$0xf]
    %v749 = vld [vmem:[#allocation11 + $0x3c] sm:$0xf]
    %v750 = vld [vmem:[%s7] sm:$0x1]
    %v752 = vlaneseq
    %v753 = vshrl.u32 %v752, 7
    %v754 = vsub.s32 0, %v753
    %v755 = vrot.slane %v750, %v754
    %v757 = vld [vmem:[%s9] sm:$0x1]
    %v759 = vlaneseq
    %v760 = vshrl.u32 %v759, 7
    %v761 = vsub.s32 0, %v760
    %v762 = vrot.slane %v757, %v761
    %v764 = vld [vmem:[%s5] sm:$0x1]
    %v766 = vlaneseq
    %v767 = vshrl.u32 %v766, 7
    %v768 = vsub.s32 0, %v767
    %v769 = vrot.slane %v764, %v768
    %v771 = vpack.c.bf16 %v769, %v769
    %v788 = vunpack.c.l.b16 %v718
    %v789 = vunpack.c.l.b16 %v719
    %v790 = vunpack.c.l.b16 %v720
    %v791 = vunpack.c.l.b16 %v721
    %v792 = vunpack.c.l.b16 %v722
    %v793 = vunpack.c.l.b16 %v723
    %v794 = vunpack.c.l.b16 %v724
    %v795 = vunpack.c.l.b16 %v725
    %v796 = vunpack.c.l.b16 %v726
    %v797 = vunpack.c.l.b16 %v727
    %v798 = vunpack.c.l.b16 %v728
    %v799 = vunpack.c.l.b16 %v729
    %v800 = vunpack.c.l.b16 %v730
    %v801 = vunpack.c.l.b16 %v731
    %v802 = vunpack.c.l.b16 %v732
    %v803 = vunpack.c.l.b16 %v733
    %v804 = vpack.c.b16 %v789, %v788
    %v805 = vpack.c.b16 %v791, %v790
    %v806 = vpack.c.b16 %v793, %v792
    %v807 = vpack.c.b16 %v795, %v794
    %v808 = vpack.c.b16 %v797, %v796
    %v809 = vpack.c.b16 %v799, %v798
    %v810 = vpack.c.b16 %v801, %v800
    %v811 = vpack.c.b16 %v803, %v802
    %820 = vmatprep.subr.bf16.mxu0 0
    %821 = vmatpush1.bf16.msra.mxu0 %v804
    %822 = vmatprep.subr.bf16.mxu0 0
    %823 = vmatpush1.bf16.msra.mxu0 %v805
    %824 = vmatprep.subr.bf16.mxu0 0
    %825 = vmatpush1.bf16.msra.mxu0 %v806
    %826 = vmatprep.subr.bf16.mxu0 0
    %827 = vmatpush1.bf16.msra.mxu0 %v807
    %828 = vmatprep.subr.bf16.mxu0 0
    %829 = vmatpush1.bf16.msra.mxu0 %v808
    %830 = vmatprep.subr.bf16.mxu0 0
    %831 = vmatpush1.bf16.msra.mxu0 %v809
    %832 = vmatprep.subr.bf16.mxu0 0
    %833 = vmatpush1.bf16.msra.mxu0 %v810
    %834 = vmatprep.subr.bf16.mxu0 0
    %835 = vmatpush1.bf16.msra.mxu0 %v811
    %836 = vmatprep.subr.bf16.mxu0 0
    %837 = vmatpush1.bf16.msra.mxu0 0
    %838 = vmatprep.subr.bf16.mxu0 0
    %839 = vmatpush1.bf16.msra.mxu0 0
    %840 = vmatprep.subr.bf16.mxu0 0
    %841 = vmatpush1.bf16.msra.mxu0 0
    %842 = vmatprep.subr.bf16.mxu0 0
    %843 = vmatpush1.bf16.msra.mxu0 0
    %844 = vmatprep.subr.bf16.mxu0 0
    %845 = vmatpush1.bf16.msra.mxu0 0
    %846 = vmatprep.subr.bf16.mxu0 0
    %847 = vmatpush1.bf16.msra.mxu0 0
    %848 = vmatprep.subr.bf16.mxu0 0
    %849 = vmatpush1.bf16.msra.mxu0 0
    %850 = vmatprep.subr.bf16.mxu0 0
    %851 = vmatpush1.bf16.msra.mxu0 0
    %852 = vmatprep.mubr.bf16.mxu0 0
    %853 = vmatmul.mubr.bf16.gmra.mrb[0].mxu0 %v771
    %v854 = vpop.f32.mrb[0].mxu0
    %v855 = vadd.f32 %v755, %v854
    %v856 = vpop.f32.mrb[0].mxu0
    %v857 = vpop.f32.mrb[0].mxu0
    %v858 = vpop.f32.mrb[0].mxu0
    %859 = vdwg.mxu0
    %v860 = vtanh.pop %v855
    %v861 = vld [vmem:[#allocation2] sm:$0xff]
    %v862 = vadd.f32 %v860, %v861
    %v863 = vmul.f32 %v862, 0.5
    %v864 = vpack.c.bf16 %v863, %v863
    %v881 = vunpack.c.l.b16 %v734
    %v882 = vunpack.c.l.b16 %v735
    %v883 = vunpack.c.l.b16 %v736
    %v884 = vunpack.c.l.b16 %v737
    %v885 = vunpack.c.l.b16 %v738
    %v886 = vunpack.c.l.b16 %v739
    %v887 = vunpack.c.l.b16 %v740
    %v888 = vunpack.c.l.b16 %v741
    %v889 = vunpack.c.l.b16 %v742
    %v890 = vunpack.c.l.b16 %v743
    %v891 = vunpack.c.l.b16 %v744
    %v892 = vunpack.c.l.b16 %v745
    %v893 = vunpack.c.l.b16 %v746
    %v894 = vunpack.c.l.b16 %v747
    %v895 = vunpack.c.l.b16 %v748
    %v896 = vunpack.c.l.b16 %v749
    %v897 = vpack.c.b16 %v882, %v881
    %v898 = vpack.c.b16 %v884, %v883
    %v899 = vpack.c.b16 %v886, %v885
    %v900 = vpack.c.b16 %v888, %v887
    %v901 = vpack.c.b16 %v890, %v889
    %v902 = vpack.c.b16 %v892, %v891
    %v903 = vpack.c.b16 %v894, %v893
    %v904 = vpack.c.b16 %v896, %v895
    %913 = vmatprep.subr.bf16.mxu0 0
    %914 = vmatpush1.bf16.msra.mxu0 %v897
    %915 = vmatprep.subr.bf16.mxu0 0
    %916 = vmatpush1.bf16.msra.mxu0 %v898
    %917 = vmatprep.subr.bf16.mxu0 0
    %918 = vmatpush1.bf16.msra.mxu0 %v899
    %919 = vmatprep.subr.bf16.mxu0 0
    %920 = vmatpush1.bf16.msra.mxu0 %v900
    %921 = vmatprep.subr.bf16.mxu0 0
    %922 = vmatpush1.bf16.msra.mxu0 %v901
    %923 = vmatprep.subr.bf16.mxu0 0
    %924 = vmatpush1.bf16.msra.mxu0 %v902
    %925 = vmatprep.subr.bf16.mxu0 0
    %926 = vmatpush1.bf16.msra.mxu0 %v903
    %927 = vmatprep.subr.bf16.mxu0 0
    %928 = vmatpush1.bf16.msra.mxu0 %v904
    %929 = vmatprep.subr.bf16.mxu0 0
    %930 = vmatpush1.bf16.msra.mxu0 0
    %931 = vmatprep.subr.bf16.mxu0 0
    %932 = vmatpush1.bf16.msra.mxu0 0
    %933 = vmatprep.subr.bf16.mxu0 0
    %934 = vmatpush1.bf16.msra.mxu0 0
    %935 = vmatprep.subr.bf16.mxu0 0
    %936 = vmatpush1.bf16.msra.mxu0 0
    %937 = vmatprep.subr.bf16.mxu0 0
    %938 = vmatpush1.bf16.msra.mxu0 0
    %939 = vmatprep.subr.bf16.mxu0 0
    %940 = vmatpush1.bf16.msra.mxu0 0
    %941 = vmatprep.subr.bf16.mxu0 0
    %942 = vmatpush1.bf16.msra.mxu0 0
    %943 = vmatprep.subr.bf16.mxu0 0
    %944 = vmatpush1.bf16.msra.mxu0 0
    %945 = vmatprep.mubr.bf16.mxu0 0
    %946 = vmatmul.mubr.bf16.gmra.mrb[0].mxu0 %v864
    %v947 = vpop.f32.mrb[0].mxu0
    %v948 = vadd.f32 %v762, %v947
    %v949 = vpop.f32.mrb[0].mxu0
    %v950 = vpop.f32.mrb[0].mxu0
    %v951 = vpop.f32.mrb[0].mxu0
    %952 = vdwg.mxu0
    %953 = vst [vmem:[#allocation2] sm:$0xff] %v948
    %v954 = vpack.c.bf16 %v948, %v948
    %955 = vmatprep.subr.bf16.mxu0 0
    %956 = vmatpush1.bf16.msra.mxu0 %v804
    %957 = vmatprep.subr.bf16.mxu0 0
    %958 = vmatpush1.bf16.msra.mxu0 %v805
    %959 = vmatprep.subr.bf16.mxu0 0
    %960 = vmatpush1.bf16.msra.mxu0 %v806
    %961 = vmatprep.subr.bf16.mxu0 0
    %962 = vmatpush1.bf16.msra.mxu0 %v807
    %963 = vmatprep.subr.bf16.mxu0 0
    %964 = vmatpush1.bf16.msra.mxu0 %v808
    %965 = vmatprep.subr.bf16.mxu0 0
    %966 = vmatpush1.bf16.msra.mxu0 %v809
    %967 = vmatprep.subr.bf16.mxu0 0
    %968 = vmatpush1.bf16.msra.mxu0 %v810
    %969 = vmatprep.subr.bf16.mxu0 0
    %970 = vmatpush1.bf16.msra.mxu0 %v811
    %971 = vmatprep.subr.bf16.mxu0 0
    %972 = vmatpush1.bf16.msra.mxu0 0
    %973 = vmatprep.subr.bf16.mxu0 0
    %974 = vmatpush1.bf16.msra.mxu0 0
    %975 = vmatprep.subr.bf16.mxu0 0
    %976 = vmatpush1.bf16.msra.mxu0 0
    %977 = vmatprep.subr.bf16.mxu0 0
    %978 = vmatpush1.bf16.msra.mxu0 0
    %979 = vmatprep.subr.bf16.mxu0 0
    %980 = vmatpush1.bf16.msra.mxu0 0
    %981 = vmatprep.subr.bf16.mxu0 0
    %982 = vmatpush1.bf16.msra.mxu0 0
    %983 = vmatprep.subr.bf16.mxu0 0
    %984 = vmatpush1.bf16.msra.mxu0 0
    %985 = vmatprep.subr.bf16.mxu0 0
    %986 = vmatpush1.bf16.msra.mxu0 0
    %987 = vmatprep.mubr.bf16.mxu0 0
    %988 = vmatmul.mubr.bf16.gmra.mrb[0].mxu0 %v954
    %v989 = vpop.f32.mrb[0].mxu0
    %v990 = vadd.f32 %v755, %v989
    %v991 = vpop.f32.mrb[0].mxu0
    %v992 = vpop.f32.mrb[0].mxu0
    %v993 = vpop.f32.mrb[0].mxu0
    %994 = vdwg.mxu0
    %v995 = vtanh.pop %v990
    %v996 = vld [vmem:[%s627] sm:$0xff]
    %v997 = vadd.f32 %v995, %v996
    %v998 = vmul.f32 %v997, 0.5
    %v999 = vpack.c.bf16 %v998, %v998
    %1000 = vmatprep.subr.bf16.mxu0 0
    %1001 = vmatpush1.bf16.msra.mxu0 %v897
    %1002 = vmatprep.subr.bf16.mxu0 0
    %1003 = vmatpush1.bf16.msra.mxu0 %v898
    %1004 = vmatprep.subr.bf16.mxu0 0
    %1005 = vmatpush1.bf16.msra.mxu0 %v899
    %1006 = vmatprep.subr.bf16.mxu0 0
    %1007 = vmatpush1.bf16.msra.mxu0 %v900
    %1008 = vmatprep.subr.bf16.mxu0 0
    %1009 = vmatpush1.bf16.msra.mxu0 %v901
    %1010 = vmatprep.subr.bf16.mxu0 0
    %1011 = vmatpush1.bf16.msra.mxu0 %v902
    %1012 = vmatprep.subr.bf16.mxu0 0
    %1013 = vmatpush1.bf16.msra.mxu0 %v903
    %1014 = vmatprep.subr.bf16.mxu0 0
    %1015 = vmatpush1.bf16.msra.mxu0 %v904
    %1016 = vmatprep.subr.bf16.mxu0 0
    %1017 = vmatpush1.bf16.msra.mxu0 0
    %1018 = vmatprep.subr.bf16.mxu0 0
    %1019 = vmatpush1.bf16.msra.mxu0 0
    %1020 = vmatprep.subr.bf16.mxu0 0
    %1021 = vmatpush1.bf16.msra.mxu0 0
    %1022 = vmatprep.subr.bf16.mxu0 0
    %1023 = vmatpush1.bf16.msra.mxu0 0
    %1024 = vmatprep.subr.bf16.mxu0 0
    %1025 = vmatpush1.bf16.msra.mxu0 0
    %1026 = vmatprep.subr.bf16.mxu0 0
    %1027 = vmatpush1.bf16.msra.mxu0 0
    %1028 = vmatprep.subr.bf16.mxu0 0
    %1029 = vmatpush1.bf16.msra.mxu0 0
    %1030 = vmatprep.subr.bf16.mxu0 0
    %1031 = vmatpush1.bf16.msra.mxu0 0
    %1032 = vmatprep.mubr.bf16.mxu0 0
    %1033 = vmatmul.mubr.bf16.gmra.mrb[0].mxu0 %v999
    %v1034 = vpop.f32.mrb[0].mxu0
    %v1035 = vadd.f32 %v762, %v1034
    %v1036 = vpop.f32.mrb[0].mxu0
    %v1037 = vpop.f32.mrb[0].mxu0
    %v1038 = vpop.f32.mrb[0].mxu0
    %1039 = vdwg.mxu0
    %1040 = vst [vmem:[%s627] sm:$0xff] %v1035
    %v1041 = vpack.c.bf16 %v1035, %v1035
    %1042 = vmatprep.subr.bf16.mxu0 0
    %1043 = vmatpush1.bf16.msra.mxu0 %v804
    %1044 = vmatprep.subr.bf16.mxu0 0
    %1045 = vmatpush1.bf16.msra.mxu0 %v805
    %1046 = vmatprep.subr.bf16.mxu0 0
    %1047 = vmatpush1.bf16.msra.mxu0 %v806
    %1048 = vmatprep.subr.bf16.mxu0 0
    %1049 = vmatpush1.bf16.msra.mxu0 %v807
    %1050 = vmatprep.subr.bf16.mxu0 0
    %1051 = vmatpush1.bf16.msra.mxu0 %v808
    %1052 = vmatprep.subr.bf16.mxu0 0
    %1053 = vmatpush1.bf16.msra.mxu0 %v809
    %1054 = vmatprep.subr.bf16.mxu0 0
    %1055 = vmatpush1.bf16.msra.mxu0 %v810
    %1056 = vmatprep.subr.bf16.mxu0 0
    %1057 = vmatpush1.bf16.msra.mxu0 %v811
    %1058 = vmatprep.subr.bf16.mxu0 0
    %1059 = vmatpush1.bf16.msra.mxu0 0
    %1060 = vmatprep.subr.bf16.mxu0 0
    %1061 = vmatpush1.bf16.msra.mxu0 0
    %1062 = vmatprep.subr.bf16.mxu0 0
    %1063 = vmatpush1.bf16.msra.mxu0 0
    %1064 = vmatprep.subr.bf16.mxu0 0
    %1065 = vmatpush1.bf16.msra.mxu0 0
    %1066 = vmatprep.subr.bf16.mxu0 0
    %1067 = vmatpush1.bf16.msra.mxu0 0
    %1068 = vmatprep.subr.bf16.mxu0 0
    %1069 = vmatpush1.bf16.msra.mxu0 0
    %1070 = vmatprep.subr.bf16.mxu0 0
    %1071 = vmatpush1.bf16.msra.mxu0 0
    %1072 = vmatprep.subr.bf16.mxu0 0
    %1073 = vmatpush1.bf16.msra.mxu0 0
    %1074 = vmatprep.mubr.bf16.mxu0 0
    %1075 = vmatmul.mubr.bf16.gmra.mrb[0].mxu0 %v1041
    %v1076 = vpop.f32.mrb[0].mxu0
    %v1077 = vadd.f32 %v755, %v1076
    %v1078 = vpop.f32.mrb[0].mxu0
    %v1079 = vpop.f32.mrb[0].mxu0
    %v1080 = vpop.f32.mrb[0].mxu0
    %1081 = vdwg.mxu0
    %v1082 = vtanh.pop %v1077
    %v1083 = vld [vmem:[%s581] sm:$0xff]
    %v1084 = vadd.f32 %v1082, %v1083
    %v1085 = vmul.f32 %v1084, 0.5
    %v1086 = vpack.c.bf16 %v1085, %v1085
    %1087 = vmatprep.subr.bf16.mxu0 0
    %1088 = vmatpush1.bf16.msra.mxu0 %v897
    %1089 = vmatprep.subr.bf16.mxu0 0
    %1090 = vmatpush1.bf16.msra.mxu0 %v898
    %1091 = vmatprep.subr.bf16.mxu0 0
    %1092 = vmatpush1.bf16.msra.mxu0 %v899
    %1093 = vmatprep.subr.bf16.mxu0 0
    %1094 = vmatpush1.bf16.msra.mxu0 %v900
    %1095 = vmatprep.subr.bf16.mxu0 0
    %1096 = vmatpush1.bf16.msra.mxu0 %v901
    %1097 = vmatprep.subr.bf16.mxu0 0
    %1098 = vmatpush1.bf16.msra.mxu0 %v902
    %1099 = vmatprep.subr.bf16.mxu0 0
    %1100 = vmatpush1.bf16.msra.mxu0 %v903
    %1101 = vmatprep.subr.bf16.mxu0 0
    %1102 = vmatpush1.bf16.msra.mxu0 %v904
    %1103 = vmatprep.subr.bf16.mxu0 0
    %1104 = vmatpush1.bf16.msra.mxu0 0
    %1105 = vmatprep.subr.bf16.mxu0 0
    %1106 = vmatpush1.bf16.msra.mxu0 0
    %1107 = vmatprep.subr.bf16.mxu0 0
    %1108 = vmatpush1.bf16.msra.mxu0 0
    %1109 = vmatprep.subr.bf16.mxu0 0
    %1110 = vmatpush1.bf16.msra.mxu0 0
    %1111 = vmatprep.subr.bf16.mxu0 0
    %1112 = vmatpush1.bf16.msra.mxu0 0
    %1113 = vmatprep.subr.bf16.mxu0 0
    %1114 = vmatpush1.bf16.msra.mxu0 0
    %1115 = vmatprep.subr.bf16.mxu0 0
    %1116 = vmatpush1.bf16.msra.mxu0 0
    %1117 = vmatprep.subr.bf16.mxu0 0
    %1118 = vmatpush1.bf16.msra.mxu0 0
    %1119 = vmatprep.mubr.bf16.mxu0 0
    %1120 = vmatmul.mubr.bf16.gmra.mrb[0].mxu0 %v1086
    %v1121 = vpop.f32.mrb[0].mxu0
    %v1122 = vadd.f32 %v762, %v1121
    %v1123 = vpop.f32.mrb[0].mxu0
    %v1124 = vpop.f32.mrb[0].mxu0
    %v1125 = vpop.f32.mrb[0].mxu0
    %1126 = vdwg.mxu0
    %1127 = vst [vmem:[%s581] sm:$0xff] %v1122
    %v1128 = vpack.c.bf16 %v1122, %v1122
    %1129 = vmatprep.subr.bf16.mxu0 0
    %1130 = vmatpush1.bf16.msra.mxu0 %v804
    %1131 = vmatprep.subr.bf16.mxu0 0
    %1132 = vmatpush1.bf16.msra.mxu0 %v805
    %1133 = vmatprep.subr.bf16.mxu0 0
    %1134 = vmatpush1.bf16.msra.mxu0 %v806
    %1135 = vmatprep.subr.bf16.mxu0 0
    %1136 = vmatpush1.bf16.msra.mxu0 %v807
    %1137 = vmatprep.subr.bf16.mxu0 0
    %1138 = vmatpush1.bf16.msra.mxu0 %v808
    %1139 = vmatprep.subr.bf16.mxu0 0
    %1140 = vmatpush1.bf16.msra.mxu0 %v809
    %1141 = vmatprep.subr.bf16.mxu0 0
    %1142 = vmatpush1.bf16.msra.mxu0 %v810
    %1143 = vmatprep.subr.bf16.mxu0 0
    %1144 = vmatpush1.bf16.msra.mxu0 %v811
    %1145 = vmatprep.subr.bf16.mxu0 0
    %1146 = vmatpush1.bf16.msra.mxu0 0
    %1147 = vmatprep.subr.bf16.mxu0 0
    %1148 = vmatpush1.bf16.msra.mxu0 0
    %1149 = vmatprep.subr.bf16.mxu0 0
    %1150 = vmatpush1.bf16.msra.mxu0 0
    %1151 = vmatprep.subr.bf16.mxu0 0
    %1152 = vmatpush1.bf16.msra.mxu0 0
    %1153 = vmatprep.subr.bf16.mxu0 0
    %1154 = vmatpush1.bf16.msra.mxu0 0
    %1155 = vmatprep.subr.bf16.mxu0 0
    %1156 = vmatpush1.bf16.msra.mxu0 0
    %1157 = vmatprep.subr.bf16.mxu0 0
    %1158 = vmatpush1.bf16.msra.mxu0 0
    %1159 = vmatprep.subr.bf16.mxu0 0
    %1160 = vmatpush1.bf16.msra.mxu0 0
    %1161 = vmatprep.mubr.bf16.mxu0 0
    %1162 = vmatmul.mubr.bf16.gmra.mrb[0].mxu0 %v1128
    %v1163 = vpop.f32.mrb[0].mxu0
    %v1164 = vadd.f32 %v755, %v1163
    %v1165 = vpop.f32.mrb[0].mxu0
    %v1166 = vpop.f32.mrb[0].mxu0
    %v1167 = vpop.f32.mrb[0].mxu0
    %1168 = vdwg.mxu0
    %v1169 = vtanh.pop %v1164
    %v1170 = vld [vmem:[%s535] sm:$0xff]
    %v1171 = vadd.f32 %v1169, %v1170
    %v1172 = vmul.f32 %v1171, 0.5
    %v1173 = vpack.c.bf16 %v1172, %v1172
    %1174 = vmatprep.subr.bf16.mxu0 0
    %1175 = vmatpush1.bf16.msra.mxu0 %v897
    %1176 = vmatprep.subr.bf16.mxu0 0
    %1177 = vmatpush1.bf16.msra.mxu0 %v898
    %1178 = vmatprep.subr.bf16.mxu0 0
    %1179 = vmatpush1.bf16.msra.mxu0 %v899
    %1180 = vmatprep.subr.bf16.mxu0 0
    %1181 = vmatpush1.bf16.msra.mxu0 %v900
    %1182 = vmatprep.subr.bf16.mxu0 0
    %1183 = vmatpush1.bf16.msra.mxu0 %v901
    %1184 = vmatprep.subr.bf16.mxu0 0
    %1185 = vmatpush1.bf16.msra.mxu0 %v902
    %1186 = vmatprep.subr.bf16.mxu0 0
    %1187 = vmatpush1.bf16.msra.mxu0 %v903
    %1188 = vmatprep.subr.bf16.mxu0 0
    %1189 = vmatpush1.bf16.msra.mxu0 %v904
    %1190 = vmatprep.subr.bf16.mxu0 0
    %1191 = vmatpush1.bf16.msra.mxu0 0
    %1192 = vmatprep.subr.bf16.mxu0 0
    %1193 = vmatpush1.bf16.msra.mxu0 0
    %1194 = vmatprep.subr.bf16.mxu0 0
    %1195 = vmatpush1.bf16.msra.mxu0 0
    %1196 = vmatprep.subr.bf16.mxu0 0
    %1197 = vmatpush1.bf16.msra.mxu0 0
    %1198 = vmatprep.subr.bf16.mxu0 0
    %1199 = vmatpush1.bf16.msra.mxu0 0
    %1200 = vmatprep.subr.bf16.mxu0 0
    %1201 = vmatpush1.bf16.msra.mxu0 0
    %1202 = vmatprep.subr.bf16.mxu0 0
    %1203 = vmatpush1.bf16.msra.mxu0 0
    %1204 = vmatprep.subr.bf16.mxu0 0
    %1205 = vmatpush1.bf16.msra.mxu0 0
    %1206 = vmatprep.mubr.bf16.mxu0 0
    %1207 = vmatmul.mubr.bf16.gmra.mrb[0].mxu0 %v1173
    %v1208 = vpop.f32.mrb[0].mxu0
    %v1209 = vadd.f32 %v762, %v1208
    %v1210 = vpop.f32.mrb[0].mxu0
    %v1211 = vpop.f32.mrb[0].mxu0
    %v1212 = vpop.f32.mrb[0].mxu0
    %1213 = vdwg.mxu0
    %1214 = vst [vmem:[%s535] sm:$0xff] %v1209
    %v1215 = vpack.c.bf16 %v1209, %v1209
    %1216 = vmatprep.subr.bf16.mxu0 0
    %1217 = vmatpush1.bf16.msra.mxu0 %v804
    %1218 = vmatprep.subr.bf16.mxu0 0
    %1219 = vmatpush1.bf16.msra.mxu0 %v805
    %1220 = vmatprep.subr.bf16.mxu0 0
    %1221 = vmatpush1.bf16.msra.mxu0 %v806
    %1222 = vmatprep.subr.bf16.mxu0 0
    %1223 = vmatpush1.bf16.msra.mxu0 %v807
    %1224 = vmatprep.subr.bf16.mxu0 0
    %1225 = vmatpush1.bf16.msra.mxu0 %v808
    %1226 = vmatprep.subr.bf16.mxu0 0
    %1227 = vmatpush1.bf16.msra.mxu0 %v809
    %1228 = vmatprep.subr.bf16.mxu0 0
    %1229 = vmatpush1.bf16.msra.mxu0 %v810
    %1230 = vmatprep.subr.bf16.mxu0 0
    %1231 = vmatpush1.bf16.msra.mxu0 %v811
    %1232 = vmatprep.subr.bf16.mxu0 0
    %1233 = vmatpush1.bf16.msra.mxu0 0
    %1234 = vmatprep.subr.bf16.mxu0 0
    %1235 = vmatpush1.bf16.msra.mxu0 0
    %1236 = vmatprep.subr.bf16.mxu0 0
    %1237 = vmatpush1.bf16.msra.mxu0 0
    %1238 = vmatprep.subr.bf16.mxu0 0
    %1239 = vmatpush1.bf16.msra.mxu0 0
    %1240 = vmatprep.subr.bf16.mxu0 0
    %1241 = vmatpush1.bf16.msra.mxu0 0
    %1242 = vmatprep.subr.bf16.mxu0 0
    %1243 = vmatpush1.bf16.msra.mxu0 0
    %1244 = vmatprep.subr.bf16.mxu0 0
    %1245 = vmatpush1.bf16.msra.mxu0 0
    %1246 = vmatprep.subr.bf16.mxu0 0
    %1247 = vmatpush1.bf16.msra.mxu0 0
    %1248 = vmatprep.mubr.bf16.mxu0 0
    %1249 = vmatmul.mubr.bf16.gmra.mrb[0].mxu0 %v1215
    %v1250 = vpop.f32.mrb[0].mxu0
    %v1251 = vadd.f32 %v755, %v1250
    %v1252 = vpop.f32.mrb[0].mxu0
    %v1253 = vpop.f32.mrb[0].mxu0
    %v1254 = vpop.f32.mrb[0].mxu0
    %1255 = vdwg.mxu0
    %v1256 = vtanh.pop %v1251
    %v1257 = vld [vmem:[%s489] sm:$0xff]
    %v1258 = vadd.f32 %v1256, %v1257
    %v1259 = vmul.f32 %v1258, 0.5
    %v1260 = vpack.c.bf16 %v1259, %v1259
    %1261 = vmatprep.subr.bf16.mxu0 0
    %1262 = vmatpush1.bf16.msra.mxu0 %v897
    %1263 = vmatprep.subr.bf16.mxu0 0
    %1264 = vmatpush1.bf16.msra.mxu0 %v898
    %1265 = vmatprep.subr.bf16.mxu0 0
    %1266 = vmatpush1.bf16.msra.mxu0 %v899
    %1267 = vmatprep.subr.bf16.mxu0 0
    %1268 = vmatpush1.bf16.msra.mxu0 %v900
    %1269 = vmatprep.subr.bf16.mxu0 0
    %1270 = vmatpush1.bf16.msra.mxu0 %v901
    %1271 = vmatprep.subr.bf16.mxu0 0
    %1272 = vmatpush1.bf16.msra.mxu0 %v902
    %1273 = vmatprep.subr.bf16.mxu0 0
    %1274 = vmatpush1.bf16.msra.mxu0 %v903
    %1275 = vmatprep.subr.bf16.mxu0 0
    %1276 = vmatpush1.bf16.msra.mxu0 %v904
    %1277 = vmatprep.subr.bf16.mxu0 0
    %1278 = vmatpush1.bf16.msra.mxu0 0
    %1279 = vmatprep.subr.bf16.mxu0 0
    %1280 = vmatpush1.bf16.msra.mxu0 0
    %1281 = vmatprep.subr.bf16.mxu0 0
    %1282 = vmatpush1.bf16.msra.mxu0 0
    %1283 = vmatprep.subr.bf16.mxu0 0
    %1284 = vmatpush1.bf16.msra.mxu0 0
    %1285 = vmatprep.subr.bf16.mxu0 0
    %1286 = vmatpush1.bf16.msra.mxu0 0
    %1287 = vmatprep.subr.bf16.mxu0 0
    %1288 = vmatpush1.bf16.msra.mxu0 0
    %1289 = vmatprep.subr.bf16.mxu0 0
    %1290 = vmatpush1.bf16.msra.mxu0 0
    %1291 = vmatprep.subr.bf16.mxu0 0
    %1292 = vmatpush1.bf16.msra.mxu0 0
    %1293 = vmatprep.mubr.bf16.mxu0 0
    %1294 = vmatmul.mubr.bf16.gmra.mrb[0].mxu0 %v1260
    %v1295 = vpop.f32.mrb[0].mxu0
    %v1296 = vadd.f32 %v762, %v1295
    %v1297 = vpop.f32.mrb[0].mxu0
    %v1298 = vpop.f32.mrb[0].mxu0
    %v1299 = vpop.f32.mrb[0].mxu0
    %1300 = vdwg.mxu0
    %1301 = vst [vmem:[%s489] sm:$0xff] %v1296
    %v1302 = vpack.c.bf16 %v1296, %v1296
    %1303 = vmatprep.subr.bf16.mxu0 0
    %1304 = vmatpush1.bf16.msra.mxu0 %v804
    %1305 = vmatprep.subr.bf16.mxu0 0
    %1306 = vmatpush1.bf16.msra.mxu0 %v805
    %1307 = vmatprep.subr.bf16.mxu0 0
    %1308 = vmatpush1.bf16.msra.mxu0 %v806
    %1309 = vmatprep.subr.bf16.mxu0 0
    %1310 = vmatpush1.bf16.msra.mxu0 %v807
    %1311 = vmatprep.subr.bf16.mxu0 0
    %1312 = vmatpush1.bf16.msra.mxu0 %v808
    %1313 = vmatprep.subr.bf16.mxu0 0
    %1314 = vmatpush1.bf16.msra.mxu0 %v809
    %1315 = vmatprep.subr.bf16.mxu0 0
    %1316 = vmatpush1.bf16.msra.mxu0 %v810
    %1317 = vmatprep.subr.bf16.mxu0 0
    %1318 = vmatpush1.bf16.msra.mxu0 %v811
    %1319 = vmatprep.subr.bf16.mxu0 0
    %1320 = vmatpush1.bf16.msra.mxu0 0
    %1321 = vmatprep.subr.bf16.mxu0 0
    %1322 = vmatpush1.bf16.msra.mxu0 0
    %1323 = vmatprep.subr.bf16.mxu0 0
    %1324 = vmatpush1.bf16.msra.mxu0 0
    %1325 = vmatprep.subr.bf16.mxu0 0
    %1326 = vmatpush1.bf16.msra.mxu0 0
    %1327 = vmatprep.subr.bf16.mxu0 0
    %1328 = vmatpush1.bf16.msra.mxu0 0
    %1329 = vmatprep.subr.bf16.mxu0 0
    %1330 = vmatpush1.bf16.msra.mxu0 0
    %1331 = vmatprep.subr.bf16.mxu0 0
    %1332 = vmatpush1.bf16.msra.mxu0 0
    %1333 = vmatprep.subr.bf16.mxu0 0
    %1334 = vmatpush1.bf16.msra.mxu0 0
    %1335 = vmatprep.mubr.bf16.mxu0 0
    %1336 = vmatmul.mubr.bf16.gmra.mrb[0].mxu0 %v1302
    %v1337 = vpop.f32.mrb[0].mxu0
    %v1338 = vadd.f32 %v755, %v1337
    %v1339 = vpop.f32.mrb[0].mxu0
    %v1340 = vpop.f32.mrb[0].mxu0
    %v1341 = vpop.f32.mrb[0].mxu0
    %1342 = vdwg.mxu0
    %v1343 = vtanh.pop %v1338
    %v1344 = vld [vmem:[%s443] sm:$0xff]
    %v1345 = vadd.f32 %v1343, %v1344
    %v1346 = vmul.f32 %v1345, 0.5
    %v1347 = vpack.c.bf16 %v1346, %v1346
    %1348 = vmatprep.subr.bf16.mxu0 0
    %1349 = vmatpush1.bf16.msra.mxu0 %v897
    %1350 = vmatprep.subr.bf16.mxu0 0
    %1351 = vmatpush1.bf16.msra.mxu0 %v898
    %1352 = vmatprep.subr.bf16.mxu0 0
    %1353 = vmatpush1.bf16.msra.mxu0 %v899
    %1354 = vmatprep.subr.bf16.mxu0 0
    %1355 = vmatpush1.bf16.msra.mxu0 %v900
    %1356 = vmatprep.subr.bf16.mxu0 0
    %1357 = vmatpush1.bf16.msra.mxu0 %v901
    %1358 = vmatprep.subr.bf16.mxu0 0
    %1359 = vmatpush1.bf16.msra.mxu0 %v902
    %1360 = vmatprep.subr.bf16.mxu0 0
    %1361 = vmatpush1.bf16.msra.mxu0 %v903
    %1362 = vmatprep.subr.bf16.mxu0 0
    %1363 = vmatpush1.bf16.msra.mxu0 %v904
    %1364 = vmatprep.subr.bf16.mxu0 0
    %1365 = vmatpush1.bf16.msra.mxu0 0
    %1366 = vmatprep.subr.bf16.mxu0 0
    %1367 = vmatpush1.bf16.msra.mxu0 0
    %1368 = vmatprep.subr.bf16.mxu0 0
    %1369 = vmatpush1.bf16.msra.mxu0 0
    %1370 = vmatprep.subr.bf16.mxu0 0
    %1371 = vmatpush1.bf16.msra.mxu0 0
    %1372 = vmatprep.subr.bf16.mxu0 0
    %1373 = vmatpush1.bf16.msra.mxu0 0
    %1374 = vmatprep.subr.bf16.mxu0 0
    %1375 = vmatpush1.bf16.msra.mxu0 0
    %1376 = vmatprep.subr.bf16.mxu0 0
    %1377 = vmatpush1.bf16.msra.mxu0 0
    %1378 = vmatprep.subr.bf16.mxu0 0
    %1379 = vmatpush1.bf16.msra.mxu0 0
    %1380 = vmatprep.mubr.bf16.mxu0 0
    %1381 = vmatmul.mubr.bf16.gmra.mrb[0].mxu0 %v1347
    %v1382 = vpop.f32.mrb[0].mxu0
    %v1383 = vadd.f32 %v762, %v1382
    %v1384 = vpop.f32.mrb[0].mxu0
    %v1385 = vpop.f32.mrb[0].mxu0
    %v1386 = vpop.f32.mrb[0].mxu0
    %1387 = vdwg.mxu0
    %1388 = vst [vmem:[%s443] sm:$0xff] %v1383
    %v1389 = vpack.c.bf16 %v1383, %v1383
    %1390 = vmatprep.subr.bf16.mxu0 0
    %1391 = vmatpush1.bf16.msra.mxu0 %v804
    %1392 = vmatprep.subr.bf16.mxu0 0
    %1393 = vmatpush1.bf16.msra.mxu0 %v805
    %1394 = vmatprep.subr.bf16.mxu0 0
    %1395 = vmatpush1.bf16.msra.mxu0 %v806
    %1396 = vmatprep.subr.bf16.mxu0 0
    %1397 = vmatpush1.bf16.msra.mxu0 %v807
    %1398 = vmatprep.subr.bf16.mxu0 0
    %1399 = vmatpush1.bf16.msra.mxu0 %v808
    %1400 = vmatprep.subr.bf16.mxu0 0
    %1401 = vmatpush1.bf16.msra.mxu0 %v809
    %1402 = vmatprep.subr.bf16.mxu0 0
    %1403 = vmatpush1.bf16.msra.mxu0 %v810
    %1404 = vmatprep.subr.bf16.mxu0 0
    %1405 = vmatpush1.bf16.msra.mxu0 %v811
    %1406 = vmatprep.subr.bf16.mxu0 0
    %1407 = vmatpush1.bf16.msra.mxu0 0
    %1408 = vmatprep.subr.bf16.mxu0 0
    %1409 = vmatpush1.bf16.msra.mxu0 0
    %1410 = vmatprep.subr.bf16.mxu0 0
    %1411 = vmatpush1.bf16.msra.mxu0 0
    %1412 = vmatprep.subr.bf16.mxu0 0
    %1413 = vmatpush1.bf16.msra.mxu0 0
    %1414 = vmatprep.subr.bf16.mxu0 0
    %1415 = vmatpush1.bf16.msra.mxu0 0
    %1416 = vmatprep.subr.bf16.mxu0 0
    %1417 = vmatpush1.bf16.msra.mxu0 0
    %1418 = vmatprep.subr.bf16.mxu0 0
    %1419 = vmatpush1.bf16.msra.mxu0 0
    %1420 = vmatprep.subr.bf16.mxu0 0
    %1421 = vmatpush1.bf16.msra.mxu0 0
    %1422 = vmatprep.mubr.bf16.mxu0 0
    %1423 = vmatmul.mubr.bf16.gmra.mrb[0].mxu0 %v1389
    %v1424 = vpop.f32.mrb[0].mxu0
    %v1425 = vadd.f32 %v755, %v1424
    %v1426 = vpop.f32.mrb[0].mxu0
    %v1427 = vpop.f32.mrb[0].mxu0
    %v1428 = vpop.f32.mrb[0].mxu0
    %1429 = vdwg.mxu0
    %v1430 = vtanh.pop %v1425
    %v1431 = vld [vmem:[%s397] sm:$0xff]
    %v1432 = vadd.f32 %v1430, %v1431
    %v1433 = vmul.f32 %v1432, 0.5
    %v1434 = vpack.c.bf16 %v1433, %v1433
    %1435 = vmatprep.subr.bf16.mxu0 0
    %1436 = vmatpush1.bf16.msra.mxu0 %v897
    %1437 = vmatprep.subr.bf16.mxu0 0
    %1438 = vmatpush1.bf16.msra.mxu0 %v898
    %1439 = vmatprep.subr.bf16.mxu0 0
    %1440 = vmatpush1.bf16.msra.mxu0 %v899
    %1441 = vmatprep.subr.bf16.mxu0 0
    %1442 = vmatpush1.bf16.msra.mxu0 %v900
    %1443 = vmatprep.subr.bf16.mxu0 0
    %1444 = vmatpush1.bf16.msra.mxu0 %v901
    %1445 = vmatprep.subr.bf16.mxu0 0
    %1446 = vmatpush1.bf16.msra.mxu0 %v902
    %1447 = vmatprep.subr.bf16.mxu0 0
    %1448 = vmatpush1.bf16.msra.mxu0 %v903
    %1449 = vmatprep.subr.bf16.mxu0 0
    %1450 = vmatpush1.bf16.msra.mxu0 %v904
    %1451 = vmatprep.subr.bf16.mxu0 0
    %1452 = vmatpush1.bf16.msra.mxu0 0
    %1453 = vmatprep.subr.bf16.mxu0 0
    %1454 = vmatpush1.bf16.msra.mxu0 0
    %1455 = vmatprep.subr.bf16.mxu0 0
    %1456 = vmatpush1.bf16.msra.mxu0 0
    %1457 = vmatprep.subr.bf16.mxu0 0
    %1458 = vmatpush1.bf16.msra.mxu0 0
    %1459 = vmatprep.subr.bf16.mxu0 0
    %1460 = vmatpush1.bf16.msra.mxu0 0
    %1461 = vmatprep.subr.bf16.mxu0 0
    %1462 = vmatpush1.bf16.msra.mxu0 0
    %1463 = vmatprep.subr.bf16.mxu0 0
    %1464 = vmatpush1.bf16.msra.mxu0 0
    %1465 = vmatprep.subr.bf16.mxu0 0
    %1466 = vmatpush1.bf16.msra.mxu0 0
    %1467 = vmatprep.mubr.bf16.mxu0 0
    %1468 = vmatmul.mubr.bf16.gmra.mrb[0].mxu0 %v1434
    %v1469 = vpop.f32.mrb[0].mxu0
    %v1470 = vadd.f32 %v762, %v1469
    %v1471 = vpop.f32.mrb[0].mxu0
    %v1472 = vpop.f32.mrb[0].mxu0
    %v1473 = vpop.f32.mrb[0].mxu0
    %1474 = vdwg.mxu0
    %1475 = vst [vmem:[%s397] sm:$0xff] %v1470
    %v1476 = vpack.c.bf16 %v1470, %v1470
    %1477 = vmatprep.subr.bf16.mxu0 0
    %1478 = vmatpush1.bf16.msra.mxu0 %v804
    %1479 = vmatprep.subr.bf16.mxu0 0
    %1480 = vmatpush1.bf16.msra.mxu0 %v805
    %1481 = vmatprep.subr.bf16.mxu0 0
    %1482 = vmatpush1.bf16.msra.mxu0 %v806
    %1483 = vmatprep.subr.bf16.mxu0 0
    %1484 = vmatpush1.bf16.msra.mxu0 %v807
    %1485 = vmatprep.subr.bf16.mxu0 0
    %1486 = vmatpush1.bf16.msra.mxu0 %v808
    %1487 = vmatprep.subr.bf16.mxu0 0
    %1488 = vmatpush1.bf16.msra.mxu0 %v809
    %1489 = vmatprep.subr.bf16.mxu0 0
    %1490 = vmatpush1.bf16.msra.mxu0 %v810
    %1491 = vmatprep.subr.bf16.mxu0 0
    %1492 = vmatpush1.bf16.msra.mxu0 %v811
    %1493 = vmatprep.subr.bf16.mxu0 0
    %1494 = vmatpush1.bf16.msra.mxu0 0
    %1495 = vmatprep.subr.bf16.mxu0 0
    %1496 = vmatpush1.bf16.msra.mxu0 0
    %1497 = vmatprep.subr.bf16.mxu0 0
    %1498 = vmatpush1.bf16.msra.mxu0 0
    %1499 = vmatprep.subr.bf16.mxu0 0
    %1500 = vmatpush1.bf16.msra.mxu0 0
    %1501 = vmatprep.subr.bf16.mxu0 0
    %1502 = vmatpush1.bf16.msra.mxu0 0
    %1503 = vmatprep.subr.bf16.mxu0 0
    %1504 = vmatpush1.bf16.msra.mxu0 0
    %1505 = vmatprep.subr.bf16.mxu0 0
    %1506 = vmatpush1.bf16.msra.mxu0 0
    %1507 = vmatprep.subr.bf16.mxu0 0
    %1508 = vmatpush1.bf16.msra.mxu0 0
    %1509 = vmatprep.mubr.bf16.mxu0 0
    %1510 = vmatmul.mubr.bf16.gmra.mrb[0].mxu0 %v1476
    %v1511 = vpop.f32.mrb[0].mxu0
    %v1512 = vadd.f32 %v755, %v1511
    %v1513 = vpop.f32.mrb[0].mxu0
    %v1514 = vpop.f32.mrb[0].mxu0
    %v1515 = vpop.f32.mrb[0].mxu0
    %1516 = vdwg.mxu0
    %v1517 = vtanh.pop %v1512
    %v1518 = vld [vmem:[%s303] sm:$0xff]
    %v1519 = vadd.f32 %v1517, %v1518
    %v1520 = vmul.f32 %v1519, 0.5
    %v1521 = vpack.c.bf16 %v1520, %v1520
    %1522 = vmatprep.subr.bf16.mxu0 0
    %1523 = vmatpush1.bf16.msra.mxu0 %v897
    %1524 = vmatprep.subr.bf16.mxu0 0
    %1525 = vmatpush1.bf16.msra.mxu0 %v898
    %1526 = vmatprep.subr.bf16.mxu0 0
    %1527 = vmatpush1.bf16.msra.mxu0 %v899
    %1528 = vmatprep.subr.bf16.mxu0 0
    %1529 = vmatpush1.bf16.msra.mxu0 %v900
    %1530 = vmatprep.subr.bf16.mxu0 0
    %1531 = vmatpush1.bf16.msra.mxu0 %v901
    %1532 = vmatprep.subr.bf16.mxu0 0
    %1533 = vmatpush1.bf16.msra.mxu0 %v902
    %1534 = vmatprep.subr.bf16.mxu0 0
    %1535 = vmatpush1.bf16.msra.mxu0 %v903
    %1536 = vmatprep.subr.bf16.mxu0 0
    %1537 = vmatpush1.bf16.msra.mxu0 %v904
    %1538 = vmatprep.subr.bf16.mxu0 0
    %1539 = vmatpush1.bf16.msra.mxu0 0
    %1540 = vmatprep.subr.bf16.mxu0 0
    %1541 = vmatpush1.bf16.msra.mxu0 0
    %1542 = vmatprep.subr.bf16.mxu0 0
    %1543 = vmatpush1.bf16.msra.mxu0 0
    %1544 = vmatprep.subr.bf16.mxu0 0
    %1545 = vmatpush1.bf16.msra.mxu0 0
    %1546 = vmatprep.subr.bf16.mxu0 0
    %1547 = vmatpush1.bf16.msra.mxu0 0
    %1548 = vmatprep.subr.bf16.mxu0 0
    %1549 = vmatpush1.bf16.msra.mxu0 0
    %1550 = vmatprep.subr.bf16.mxu0 0
    %1551 = vmatpush1.bf16.msra.mxu0 0
    %1552 = vmatprep.subr.bf16.mxu0 0
    %1553 = vmatpush1.bf16.msra.mxu0 0
    %1554 = vmatprep.mubr.bf16.mxu0 0
    %1555 = vmatmul.mubr.bf16.gmra.mrb[0].mxu0 %v1521
    %v1556 = vpop.f32.mrb[0].mxu0
    %v1557 = vadd.f32 %v762, %v1556
    %v1558 = vpop.f32.mrb[0].mxu0
    %v1559 = vpop.f32.mrb[0].mxu0
    %v1560 = vpop.f32.mrb[0].mxu0
    %1561 = vdwg.mxu0
    %1562 = vst [vmem:[%s303] sm:$0xff] %v1557
    %v1563 = vld [vmem:[#allocation2] sm:$0xff]
    %v1564 = vld [vmem:[#allocation2 + $0x8] sm:$0xff]
    %v1565 = vld [vmem:[#allocation2 + $0x10] sm:$0xff]
    %v1566 = vld [vmem:[#allocation2 + $0x18] sm:$0xff]
    %v1567 = vld [vmem:[#allocation2 + $0x20] sm:$0xff]
    %v1568 = vld [vmem:[#allocation2 + $0x28] sm:$0xff]
    %v1569 = vld [vmem:[#allocation2 + $0x30] sm:$0xff]
    %v1570 = vld [vmem:[#allocation2 + $0x38] sm:$0xff]
    %v1571 = vpack.c.bf16 %v1564, %v1563
    %v1572 = vpack.c.bf16 %v1566, %v1565
    %v1573 = vpack.c.bf16 %v1568, %v1567
    %v1574 = vpack.c.bf16 %v1570, %v1569
    %v1575 = vld [vmem:[#allocation12] sm:$0xf]
    %v1576 = vld [vmem:[#allocation12 + $0x4] sm:$0xf]
    %v1577 = vld [vmem:[#allocation12 + $0x8] sm:$0xf]
    %v1578 = vld [vmem:[#allocation12 + $0xc] sm:$0xf]
    %v1579 = vld [vmem:[#allocation12 + $0x10] sm:$0xf]
    %v1580 = vld [vmem:[#allocation12 + $0x14] sm:$0xf]
    %v1581 = vld [vmem:[#allocation12 + $0x18] sm:$0xf]
    %v1582 = vld [vmem:[#allocation12 + $0x1c] sm:$0xf]
    %v1583 = vld [vmem:[#allocation12 + $0x20] sm:$0xf]
    %v1584 = vld [vmem:[#allocation12 + $0x24] sm:$0xf]
    %v1585 = vld [vmem:[#allocation12 + $0x28] sm:$0xf]
    %v1586 = vld [vmem:[#allocation12 + $0x2c] sm:$0xf]
    %v1587 = vld [vmem:[#allocation12 + $0x30] sm:$0xf]
    %v1588 = vld [vmem:[#allocation12 + $0x34] sm:$0xf]
    %v1589 = vld [vmem:[#allocation12 + $0x38] sm:$0xf]
    %v1590 = vld [vmem:[#allocation12 + $0x3c] sm:$0xf]
    %v1591 = vld [vmem:[%s11] sm:$0x1]
    %v1593 = vlaneseq
    %v1594 = vshrl.u32 %v1593, 7
    %v1595 = vsub.s32 0, %v1594
    %v1596 = vrot.slane %v1591, %v1595
    %v1614 = vunpack.c.l.b16 %v1575
    %v1615 = vunpack.c.l.b16 %v1576
    %v1616 = vunpack.c.l.b16 %v1577
    %v1617 = vunpack.c.l.b16 %v1578
    %v1618 = vunpack.c.l.b16 %v1579
    %v1619 = vunpack.c.l.b16 %v1580
    %v1620 = vunpack.c.l.b16 %v1581
    %v1621 = vunpack.c.l.b16 %v1582
    %v1622 = vunpack.c.l.b16 %v1583
    %v1623 = vunpack.c.l.b16 %v1584
    %v1624 = vunpack.c.l.b16 %v1585
    %v1625 = vunpack.c.l.b16 %v1586
    %v1626 = vunpack.c.l.b16 %v1587
    %v1627 = vunpack.c.l.b16 %v1588
    %v1628 = vunpack.c.l.b16 %v1589
    %v1629 = vunpack.c.l.b16 %v1590
    %v1630 = vpack.c.b16 %v1615, %v1614
    %v1631 = vpack.c.b16 %v1617, %v1616
    %v1632 = vpack.c.b16 %v1619, %v1618
    %v1633 = vpack.c.b16 %v1621, %v1620
    %v1634 = vpack.c.b16 %v1623, %v1622
    %v1635 = vpack.c.b16 %v1625, %v1624
    %v1636 = vpack.c.b16 %v1627, %v1626
    %v1637 = vpack.c.b16 %v1629, %v1628
    %1646 = vmatprep.subr.bf16.mxu0 0
    %1647 = vmatpush1.bf16.msra.mxu0 %v1630
    %1648 = vmatprep.subr.bf16.mxu0 0
    %1649 = vmatpush1.bf16.msra.mxu0 %v1631
    %1650 = vmatprep.subr.bf16.mxu0 0
    %1651 = vmatpush1.bf16.msra.mxu0 %v1632
    %1652 = vmatprep.subr.bf16.mxu0 0
    %1653 = vmatpush1.bf16.msra.mxu0 %v1633
    %1654 = vmatprep.subr.bf16.mxu0 0
    %1655 = vmatpush1.bf16.msra.mxu0 %v1634
    %1656 = vmatprep.subr.bf16.mxu0 0
    %1657 = vmatpush1.bf16.msra.mxu0 %v1635
    %1658 = vmatprep.subr.bf16.mxu0 0
    %1659 = vmatpush1.bf16.msra.mxu0 %v1636
    %1660 = vmatprep.subr.bf16.mxu0 0
    %1661 = vmatpush1.bf16.msra.mxu0 %v1637
    %1662 = vmatprep.subr.bf16.mxu0 0
    %1663 = vmatpush1.bf16.msra.mxu0 0
    %1664 = vmatprep.subr.bf16.mxu0 0
    %1665 = vmatpush1.bf16.msra.mxu0 0
    %1666 = vmatprep.subr.bf16.mxu0 0
    %1667 = vmatpush1.bf16.msra.mxu0 0
    %1668 = vmatprep.subr.bf16.mxu0 0
    %1669 = vmatpush1.bf16.msra.mxu0 0
    %1670 = vmatprep.subr.bf16.mxu0 0
    %1671 = vmatpush1.bf16.msra.mxu0 0
    %1672 = vmatprep.subr.bf16.mxu0 0
    %1673 = vmatpush1.bf16.msra.mxu0 0
    %1674 = vmatprep.subr.bf16.mxu0 0
    %1675 = vmatpush1.bf16.msra.mxu0 0
    %1676 = vmatprep.subr.bf16.mxu0 0
    %1677 = vmatpush1.bf16.msra.mxu0 0
    %1678 = vmatprep.mubr.bf16.mxu0 0
    %1679 = vmatmul.mubr.bf16.gmra.mrb[0].mxu0 %v1571
    %v1680 = vpop.f32.mrb[0].mxu0
    %v1681 = vadd.f32 %v1596, %v1680
    %v1682 = vpop.f32.mrb[0].mxu0
    %v1683 = vpop.f32.mrb[0].mxu0
    %v1684 = vadd.f32 %v1596, %v1683
    %v1685 = vpop.f32.mrb[0].mxu0
    %1686 = vmatprep.mubr.bf16.mxu0 0
    %1687 = vmatmul.mubr.bf16.gmra.mrb[0].mxu0 %v1572
    %v1688 = vpop.f32.mrb[0].mxu0
    %v1689 = vadd.f32 %v1596, %v1688
    %v1690 = vpop.f32.mrb[0].mxu0
    %v1691 = vpop.f32.mrb[0].mxu0
    %v1692 = vadd.f32 %v1596, %v1691
    %v1693 = vpop.f32.mrb[0].mxu0
    %1694 = vmatprep.mubr.bf16.mxu0 0
    %1695 = vmatmul.mubr.bf16.gmra.mrb[0].mxu0 %v1573
    %v1696 = vpop.f32.mrb[0].mxu0
    %v1697 = vadd.f32 %v1596, %v1696
    %v1698 = vpop.f32.mrb[0].mxu0
    %v1699 = vpop.f32.mrb[0].mxu0
    %v1700 = vadd.f32 %v1596, %v1699
    %v1701 = vpop.f32.mrb[0].mxu0
    %1702 = vmatprep.mubr.bf16.mxu0 0
    %1703 = vmatmul.mubr.bf16.gmra.mrb[0].mxu0 %v1574
    %v1704 = vpop.f32.mrb[0].mxu0
    %v1705 = vadd.f32 %v1596, %v1704
    %v1706 = vpop.f32.mrb[0].mxu0
    %v1707 = vpop.f32.mrb[0].mxu0
    %v1708 = vadd.f32 %v1596, %v1707
    %v1709 = vpop.f32.mrb[0].mxu0
    %1710 = vdwg.mxu0
    %1711 = vst [vmem:[#allocation14] sm:$0xff] %v1681
    %1712 = vst [vmem:[#allocation14 + $0x8] sm:$0xff] %v1684
    %1713 = vst [vmem:[#allocation14 + $0x10] sm:$0xff] %v1689
    %1714 = vst [vmem:[#allocation14 + $0x18] sm:$0xff] %v1692
    %1715 = vst [vmem:[#allocation14 + $0x20] sm:$0xff] %v1697
    %1716 = vst [vmem:[#allocation14 + $0x28] sm:$0xff] %v1700
    %1717 = vst [vmem:[#allocation14 + $0x30] sm:$0xff] %v1705
    %1718 = vst [vmem:[#allocation14 + $0x38] sm:$0xff] %v1708
    // Predicated region
    $region74: #{tpu_custom_call.1} parent=1 // pred_check
      _
    $region75: #{tpu_custom_call.1} parent=1 // pred_check_branch
      %1720 = sbr.rel (0) target = $region77
    $region76: #{tpu_custom_call.1} parent=1 // pred_region
      %s1722 = ssub.s32 1024, 1024
      %1723 = vsyncadd [#allocation5], %s1722
      %s1724 = sshll.u32 [#allocation14], 4
      %s1725 = int_to_ptr.vmem [resolvable:$true] %s1724
      %1730 = dma.vmem_to_hbm [thread:$0]  %s1725, 1024, %s12, [#allocation5], 128, 128, 8
    $region77: #{tpu_custom_call.1} parent=1 // pred_fallthru
      _
    // Predicated region
    $region78: #{tpu_custom_call.1} parent=1 // pred_check
      _
    $region79: #{tpu_custom_call.1} parent=1 // pred_check_branch
      %1732 = sbr.rel (0) target = $region81
    $region80: #{tpu_custom_call.1} parent=1 // pred_region
      %1733 = dma.done [#allocation5], 1024
    $region81: #{tpu_custom_call.1} parent=1 // pred_fallthru
      _
    %1734 = vsyncpa [#allocation4], 1
    %1735 = vsyncpa [#allocation7], 1
    %1736 = vsyncpa [#allocation10], 1
    %1737 = vsyncpa [#allocation13], 1
    %1738 = vsyncpa [#allocation5], 1

</llo_original>
